<compile_context>
chip_gen: v6e
topology: v6e:2x2x1
jax: 0.10.0
libtpu: 0.0.40
codegen_flags: <defaults>
</compile_context>

<pallas_src>
import jax
import jax.numpy as jnp
from jax.experimental import pallas as pl
from jax.experimental.pallas import tpu as pltpu

FEAT_DIM = 512            # CLIP feature dim
HIDDEN_DIM = 128          # classifier hidden dim
NUM_CLASSES = 11          # classifier output classes
NUM_CLASSES_PAD = 128     # padded to a lane-dense multiple of 128 for the store
LN_EPS = 1e-5             # torch.nn.LayerNorm default eps
DEFAULT_BATCH_TILE = 512  # 512-wide tiles sit near the HBM roofline on v6e/v7x


def _round_up(x, m):
    return (x + m - 1) // m * m


def _fused_clip_kernel(flat_ref, proj_ref, w1_ref, b1_ref, w2_ref, b2_ref,
                       o_ref):
    """Per batch-tile: encoder projection + LayerNorm + Linear/ReLU/Linear.

    Matmuls run on the MXU with bf16 operands and f32 accumulation; the
    LayerNorm statistics are computed in f32 on the VPU/XLU in a single pass.
    The LayerNorm affine (gamma/beta) is folded into w1/b1 by the wrapper.
    """
    flat = flat_ref[...]                                        # [TB, Din] bf16

    # Synthetic frozen "encoder": flattened image -> 512-d features.
    # TODO(synk): the real CLIP ViT image encoder has no in-script equivalent;
    # replaced by a fixed linear projection fused into this kernel.
    feats = jnp.dot(flat, proj_ref[...],
                    preferred_element_type=jnp.float32)         # [TB, 512] f32

    # One-pass LayerNorm over the last axis: var = E[x^2] - mu^2
    # (affine folded into W1/b1 outside; eps keeps tiny negative var benign).
    mu = jnp.mean(feats, axis=-1, keepdims=True)
    mean_sq = jnp.mean(feats * feats, axis=-1, keepdims=True)
    var = mean_sq - mu * mu
    xn = (feats - mu) * jax.lax.rsqrt(var + LN_EPS)             # [TB, 512] f32

    # Linear(512 -> 128) + ReLU  (bf16 MXU, f32 accumulation).
    h = jnp.dot(xn.astype(jnp.bfloat16), w1_ref[...],
                preferred_element_type=jnp.float32) + b1_ref[...]
    h = jnp.maximum(h, 0.0)                                     # [TB, 128] f32

    # Linear(128 -> num_classes), zero-padded to 128 lanes for a dense store.
    out = jnp.dot(h.astype(jnp.bfloat16), w2_ref[...],
                  preferred_element_type=jnp.float32)
    o_ref[...] = out + b2_ref[...]                              # [TB, 128] f32


def prepare_params(params):
    """One-time parameter prep (hoisted out of the forward call).

    - Fold the LayerNorm affine into the first Linear:
        W1' = gamma[:,None] * W1,  b1' = b1 + beta @ W1
    - Zero-pad W2/b2 to 128 output lanes.
    - Cast matmul weights to bf16 (biases stay f32).
    """
    gamma = params["ln_gamma"].astype(jnp.float32)
    beta = params["ln_beta"].astype(jnp.float32)
    w1 = params["w1"].astype(jnp.float32)
    b1 = params["b1"].astype(jnp.float32)
    w2 = params["w2"].astype(jnp.float32)
    b2 = params["b2"].astype(jnp.float32)

    w1_folded = gamma[:, None] * w1                          # [512, 128]
    b1_folded = b1 + beta @ w1                               # [128]

    w2_pad = jnp.zeros((HIDDEN_DIM, NUM_CLASSES_PAD), jnp.float32)
    w2_pad = w2_pad.at[:, :NUM_CLASSES].set(w2)
    b2_pad = jnp.zeros((NUM_CLASSES_PAD,), jnp.float32)
    b2_pad = b2_pad.at[:NUM_CLASSES].set(b2)

    return {
        "proj": params["encoder_proj"].astype(jnp.bfloat16),  # [Din, 512]
        "w1": w1_folded.astype(jnp.bfloat16),                 # [512, 128]
        "b1": b1_folded.reshape(1, HIDDEN_DIM),               # [1, 128] f32
        "w2": w2_pad.astype(jnp.bfloat16),                    # [128, 128]
        "b2": b2_pad.reshape(1, NUM_CLASSES_PAD),              # [1, 128] f32
    }


def _choose_batch_tile(B, batch_tile):
    """Sublane-multiple batch tile; keep >=2 grid steps so v7x's two
    TensorCores both get work when the batch allows it."""
    tb = min(batch_tile, _round_up(B, 8))
    if B > 8 and pl.cdiv(B, tb) < 2:
        tb = max(8, _round_up(pl.cdiv(B, 2), 8))
    return tb


def _vmem_limit_bytes(tb, d_in):
    """Scoped-VMEM budget: every BlockSpec buffer is double-buffered."""
    bf16, f32 = 2, 4
    per_buf = (tb * d_in * bf16                      # flat tile (streamed)
               + tb * NUM_CLASSES_PAD * f32          # output tile
               + d_in * FEAT_DIM * bf16              # proj (resident)
               + FEAT_DIM * HIDDEN_DIM * bf16        # w1
               + HIDDEN_DIM * NUM_CLASSES_PAD * bf16  # w2
               + (HIDDEN_DIM + NUM_CLASSES_PAD) * f32)  # biases
    total = 2 * per_buf
    # 1.5x headroom, clamped to [16 MiB, 64 MiB] (v7x physical VMEM is 64 MiB).
    return int(min(64 << 20, max(16 << 20, int(total * 1.5))))


def clip_classifier_forward(x, prepped, *, batch_tile=DEFAULT_BATCH_TILE):
    """Full forward: NCHW image batch -> [B, NUM_CLASSES] logits."""
    B = x.shape[0]
    # bf16 activations: halves HBM->VMEM traffic of the only streamed operand
    # and removes the in-kernel [tb, Din] cast (the heaviest VALU op).
    flat = x.reshape(B, -1).astype(jnp.bfloat16)               # [B, Din] bf16
    d_in = flat.shape[1]

    tb = _choose_batch_tile(B, batch_tile)
    # No HBM-side padding: cdiv grid, the trailing block may be partial.
    # Safe because every op is row-wise and OOB output rows are discarded.
    grid = (pl.cdiv(B, tb),)

    out_pad = pl.pallas_call(
        _fused_clip_kernel,
        out_shape=jax.ShapeDtypeStruct((B, NUM_CLASSES_PAD), jnp.float32),
        grid_spec=pltpu.PrefetchScalarGridSpec(
            num_scalar_prefetch=0,
            grid=grid,
            in_specs=[
                # batch-tiled activations (pipelined HBM<->VMEM DMA)
                pl.BlockSpec((tb, d_in), lambda i: (i, 0)),
                # weights/biases: constant index maps -> VMEM-resident, no re-DMA
                pl.BlockSpec((d_in, FEAT_DIM), lambda i: (0, 0)),
                pl.BlockSpec((FEAT_DIM, HIDDEN_DIM), lambda i: (0, 0)),
                pl.BlockSpec((1, HIDDEN_DIM), lambda i: (0, 0)),
                pl.BlockSpec((HIDDEN_DIM, NUM_CLASSES_PAD), lambda i: (0, 0)),
                pl.BlockSpec((1, NUM_CLASSES_PAD), lambda i: (0, 0)),
            ],
            out_specs=pl.BlockSpec((tb, NUM_CLASSES_PAD), lambda i: (i, 0)),
        ),
        compiler_params=pltpu.CompilerParams(
            dimension_semantics=("parallel",),      # megacore-shardable batch axis
            vmem_limit_bytes=_vmem_limit_bytes(tb, d_in)),
    )(flat, prepped["proj"], prepped["w1"], prepped["b1"],
      prepped["w2"], prepped["b2"])

    return out_pad[:, :NUM_CLASSES]


def init_params(key, in_features):
    ks = jax.random.split(key, 7)
    return {
        # frozen synthetic "encoder" projection: flattened image -> 512
        "encoder_proj": jax.random.normal(ks[0], (in_features, FEAT_DIM),
                                          jnp.float32) * 0.02,
        # nn.LayerNorm(512) affine (randomized slightly to exercise the fold)
        "ln_gamma": 1.0 + 0.1 * jax.random.normal(ks[1], (FEAT_DIM,), jnp.float32),
        "ln_beta": 0.05 * jax.random.normal(ks[2], (FEAT_DIM,), jnp.float32),
        # nn.Linear(512, 128)
        "w1": jax.random.normal(ks[3], (FEAT_DIM, HIDDEN_DIM),
                                jnp.float32) * (1.0 / FEAT_DIM ** 0.5),
        "b1": jax.random.normal(ks[4], (HIDDEN_DIM,), jnp.float32) * 0.01,
        # nn.Linear(128, 11)
        "w2": jax.random.normal(ks[5], (HIDDEN_DIM, NUM_CLASSES),
                                jnp.float32) * (1.0 / HIDDEN_DIM ** 0.5),
        "b2": jax.random.normal(ks[6], (NUM_CLASSES,), jnp.float32) * 0.01,
    }


def _mirror_reference(x, prepped):
    """Pure-JAX reference with identical bf16 casts / folded params / LN math."""
    B = x.shape[0]
    flat = x.reshape(B, -1).astype(jnp.bfloat16)
    feats = jnp.dot(flat, prepped["proj"], preferred_element_type=jnp.float32)
    mu = feats.mean(-1, keepdims=True)
    var = (feats * feats).mean(-1, keepdims=True) - mu * mu
    xn = (feats - mu) * jax.lax.rsqrt(var + LN_EPS)
    h = jnp.maximum(jnp.dot(xn.astype(jnp.bfloat16), prepped["w1"],
                            preferred_element_type=jnp.float32)
                    + prepped["b1"], 0.0)
    out = jnp.dot(h.astype(jnp.bfloat16), prepped["w2"],
                  preferred_element_type=jnp.float32) + prepped["b2"]
    return out[:, :NUM_CLASSES]


def _f32_reference(x, params):
    """Full-precision reference of the original module semantics (unfolded)."""
    B = x.shape[0]
    flat = x.reshape(B, -1).astype(jnp.float32)
    feats = flat @ params["encoder_proj"]
    mu = feats.mean(-1, keepdims=True)
    var = ((feats - mu) ** 2).mean(-1, keepdims=True)
    xn = (feats - mu) / jnp.sqrt(var + LN_EPS)
    xn = xn * params["ln_gamma"] + params["ln_beta"]
    h = jnp.maximum(xn @ params["w1"] + params["b1"], 0.0)
    return h @ params["w2"] + params["b2"]


if __name__ == "__main__":
    key = jax.random.PRNGKey(0)
    k_x, k_p = jax.random.split(key)

    # Small NCHW image batch (PyTorch layout): [B, C, H, W] = [2, 3, 16, 16]
    B, C, H, W = 2, 3, 16, 16
    x = jax.random.normal(k_x, (B, C, H, W), jnp.float32)

    params = init_params(k_p, C * H * W)
    prepped = prepare_params(params)        # one-time fold/pad/cast (hoisted)

    logits = clip_classifier_forward(x, prepped)
    jax.block_until_ready(logits)
    assert logits.shape == (B, NUM_CLASSES), logits.shape

    # Tight check against a reference that mirrors the kernel's bf16 math.
    ref_bf16 = _mirror_reference(x, prepped)
    assert jnp.allclose(logits, ref_bf16, atol=1e-2, rtol=1e-2), (
        float(jnp.max(jnp.abs(logits - ref_bf16))))

    # Loose check against the full-f32 module semantics (unfolded LN affine).
    ref_f32 = _f32_reference(x, params)
    assert jnp.allclose(logits, ref_f32, atol=1e-1, rtol=1e-1), (
        float(jnp.max(jnp.abs(logits - ref_f32))))

    print("KERNEL_OK")
</pallas_src>

<mosaic_0001>
module attributes {stable_mosaic.version = 11 : i64} {
  func.func @_fused_clip_kernel(%arg0: i32, %arg1: memref<8x768xbf16, #tpu.memory_space<vmem>>, %arg2: memref<768x512xbf16, #tpu.memory_space<vmem>>, %arg3: memref<512x128xbf16, #tpu.memory_space<vmem>>, %arg4: memref<1x128xf32, #tpu.memory_space<vmem>>, %arg5: memref<128x128xbf16, #tpu.memory_space<vmem>>, %arg6: memref<1x128xf32, #tpu.memory_space<vmem>>, %arg7: memref<8x128xf32, #tpu.memory_space<vmem>>) attributes {dimension_semantics = [#tpu.dimension_semantics<parallel>], iteration_bounds = array<i64: 1>, scalar_prefetch = 0 : i64, scratch_operands = 0 : i64, tpu.core_type = #tpu.core_type<tc>, window_params = [{transform_indices = @transform_0, window_bounds = array<i64: 8, 768>}, {pipeline_mode = #tpu.pipeline_mode<synchronous>, transform_indices = @transform_1, window_bounds = array<i64: 768, 512>}, {pipeline_mode = #tpu.pipeline_mode<synchronous>, transform_indices = @transform_2, window_bounds = array<i64: 512, 128>}, {pipeline_mode = #tpu.pipeline_mode<synchronous>, transform_indices = @transform_3, window_bounds = array<i64: 1, 128>}, {pipeline_mode = #tpu.pipeline_mode<synchronous>, transform_indices = @transform_4, window_bounds = array<i64: 128, 128>}, {pipeline_mode = #tpu.pipeline_mode<synchronous>, transform_indices = @transform_5, window_bounds = array<i64: 1, 128>}, {transform_indices = @transform_6, window_bounds = array<i64: 8, 128>}]} {
    %c0 = arith.constant 0 : index
    %c0_0 = arith.constant 0 : index
    %0 = vector.load %arg1[%c0, %c0_0] : memref<8x768xbf16, #tpu.memory_space<vmem>>, vector<8x768xbf16>
    %c0_1 = arith.constant 0 : index
    %c0_2 = arith.constant 0 : index
    %1 = vector.load %arg2[%c0_1, %c0_2] : memref<768x512xbf16, #tpu.memory_space<vmem>>, vector<768x512xbf16>
    %cst = arith.constant dense<0.000000e+00> : vector<8x512xf32>
    %2 = tpu.matmul %0, %1, %cst {dimension_numbers = #tpu.dot_dimension_numbers<[1], [0], [0], [1], [0, 0, 1, 1], [], []>} : vector<8x768xbf16>, vector<768x512xbf16>, vector<8x512xf32> -> vector<8x512xf32>
    %cst_3 = arith.constant dense<0.000000e+00> : vector<8xf32>
    %3 = vector.multi_reduction <add>, %2, %cst_3 [1] : vector<8x512xf32> to vector<8xf32>
    %4 = vector.shape_cast %3 : vector<8xf32> to vector<8x1xf32>
    %cst_4 = arith.constant 5.120000e+02 : f32
    %5 = vector.broadcast %cst_4 : f32 to vector<8x1xf32>
    %6 = arith.divf %4, %5 : vector<8x1xf32>
    %7 = arith.mulf %2, %2 : vector<8x512xf32>
    %cst_5 = arith.constant dense<0.000000e+00> : vector<8xf32>
    %8 = vector.multi_reduction <add>, %7, %cst_5 [1] : vector<8x512xf32> to vector<8xf32>
    %9 = vector.shape_cast %8 : vector<8xf32> to vector<8x1xf32>
    %cst_6 = arith.constant 5.120000e+02 : f32
    %10 = vector.broadcast %cst_6 : f32 to vector<8x1xf32>
    %11 = arith.divf %9, %10 : vector<8x1xf32>
    %12 = arith.mulf %6, %6 : vector<8x1xf32>
    %13 = arith.subf %11, %12 : vector<8x1xf32>
    %14 = vector.broadcast %6 : vector<8x1xf32> to vector<8x512xf32>
    %15 = arith.subf %2, %14 : vector<8x512xf32>
    %cst_7 = arith.constant 9.99999974E-6 : f32
    %16 = vector.broadcast %cst_7 : f32 to vector<8x1xf32>
    %17 = arith.addf %13, %16 : vector<8x1xf32>
    %18 = math.rsqrt %17 : vector<8x1xf32>
    %19 = vector.broadcast %18 : vector<8x1xf32> to vector<8x512xf32>
    %20 = arith.mulf %15, %19 : vector<8x512xf32>
    %21 = arith.truncf %20 : vector<8x512xf32> to vector<8x512xbf16>
    %c0_8 = arith.constant 0 : index
    %c0_9 = arith.constant 0 : index
    %22 = vector.load %arg3[%c0_8, %c0_9] : memref<512x128xbf16, #tpu.memory_space<vmem>>, vector<512x128xbf16>
    %cst_10 = arith.constant dense<0.000000e+00> : vector<8x128xf32>
    %23 = tpu.matmul %21, %22, %cst_10 {dimension_numbers = #tpu.dot_dimension_numbers<[1], [0], [0], [1], [0, 0, 1, 1], [], []>} : vector<8x512xbf16>, vector<512x128xbf16>, vector<8x128xf32> -> vector<8x128xf32>
    %c0_11 = arith.constant 0 : index
    %c0_12 = arith.constant 0 : index
    %24 = vector.load %arg4[%c0_11, %c0_12] : memref<1x128xf32, #tpu.memory_space<vmem>>, vector<1x128xf32>
    %25 = vector.broadcast %24 : vector<1x128xf32> to vector<8x128xf32>
    %26 = arith.addf %23, %25 : vector<8x128xf32>
    %cst_13 = arith.constant 0.000000e+00 : f32
    %27 = vector.broadcast %cst_13 : f32 to vector<8x128xf32>
    %28 = arith.maximumf %26, %27 : vector<8x128xf32>
    %29 = arith.truncf %28 : vector<8x128xf32> to vector<8x128xbf16>
    %c0_14 = arith.constant 0 : index
    %c0_15 = arith.constant 0 : index
    %30 = vector.load %arg5[%c0_14, %c0_15] : memref<128x128xbf16, #tpu.memory_space<vmem>>, vector<128x128xbf16>
    %cst_16 = arith.constant dense<0.000000e+00> : vector<8x128xf32>
    %31 = tpu.matmul %29, %30, %cst_16 {dimension_numbers = #tpu.dot_dimension_numbers<[1], [0], [0], [1], [0, 0, 1, 1], [], []>} : vector<8x128xbf16>, vector<128x128xbf16>, vector<8x128xf32> -> vector<8x128xf32>
    %c0_17 = arith.constant 0 : index
    %c0_18 = arith.constant 0 : index
    %32 = vector.load %arg6[%c0_17, %c0_18] : memref<1x128xf32, #tpu.memory_space<vmem>>, vector<1x128xf32>
    %33 = vector.broadcast %32 : vector<1x128xf32> to vector<8x128xf32>
    %34 = arith.addf %31, %33 : vector<8x128xf32>
    %c0_19 = arith.constant 0 : index
    %c0_20 = arith.constant 0 : index
    %35 = vector.load %arg7[%c0_19, %c0_20] : memref<8x128xf32, #tpu.memory_space<vmem>>, vector<8x128xf32>
    tpu.vector_store %arg7[%c0_19, %c0_20], %34 {strides = array<i32>} : memref<8x128xf32, #tpu.memory_space<vmem>>, vector<8x128xf32>,
    return
  }
  func.func @transform_0(%arg0: i32) -> (i32, i32) {
    %c0_i32 = arith.constant 0 : i32
    %c0_i32_0 = arith.constant 0 : i32
    return %arg0, %c0_i32 : i32, i32
  }
  func.func @transform_1(%arg0: i32) -> (i32, i32) {
    %c0_i32 = arith.constant 0 : i32
    %c0_i32_0 = arith.constant 0 : i32
    %c0_i32_1 = arith.constant 0 : i32
    return %c0_i32, %c0_i32_0 : i32, i32
  }
  func.func @transform_2(%arg0: i32) -> (i32, i32) {
    %c0_i32 = arith.constant 0 : i32
    %c0_i32_0 = arith.constant 0 : i32
    %c0_i32_1 = arith.constant 0 : i32
    return %c0_i32, %c0_i32_0 : i32, i32
  }
  func.func @transform_3(%arg0: i32) -> (i32, i32) {
    %c0_i32 = arith.constant 0 : i32
    %c0_i32_0 = arith.constant 0 : i32
    %c0_i32_1 = arith.constant 0 : i32
    return %c0_i32, %c0_i32_0 : i32, i32
  }
  func.func @transform_4(%arg0: i32) -> (i32, i32) {
    %c0_i32 = arith.constant 0 : i32
    %c0_i32_0 = arith.constant 0 : i32
    %c0_i32_1 = arith.constant 0 : i32
    return %c0_i32, %c0_i32_0 : i32, i32
  }
  func.func @transform_5(%arg0: i32) -> (i32, i32) {
    %c0_i32 = arith.constant 0 : i32
    %c0_i32_0 = arith.constant 0 : i32
    %c0_i32_1 = arith.constant 0 : i32
    return %c0_i32, %c0_i32_0 : i32, i32
  }
  func.func @transform_6(%arg0: i32) -> (i32, i32) {
    %c0_i32 = arith.constant 0 : i32
    %c0_i32_0 = arith.constant 0 : i32
    return %arg0, %c0_i32 : i32, i32
  }
}

</mosaic_0001>

<llo_original>
// kernel: tpu_custom_call.1
$region0: #{tpu_custom_call.1}
  #allocation0 [shape = 'u32[]', space=smem, size = 0x4, offset = 0x4, fixed_abs, tag = 'smem constant byte address 0x4 - core index']
  #allocation1 [shape = 'u32[144,128]{1,0:T(1,128)}', space=vmem, size = 0x12000, scoped, tag = 'internal scratch']
  %s0 = inlined_call_operand.hbm [shape: bf16[2,768], index: 0, kind: input, shape index: {}]
  %s1 = inlined_call_operand.hbm [shape: bf16[768,512], index: 1, kind: input, shape index: {}]
  %s2 = inlined_call_operand.hbm [shape: bf16[512,128], index: 2, kind: input, shape index: {}]
  %s3 = inlined_call_operand.vmem [shape: f32[1,128], index: 3, kind: input, shape index: {}]
  %s4 = inlined_call_operand.hbm [shape: bf16[128,128], index: 4, kind: input, shape index: {}]
  %s5 = inlined_call_operand.vmem [shape: f32[1,128], index: 5, kind: input, shape index: {}]
  %s6 = inlined_call_operand.hbm [shape: f32[2,128], index: 6, kind: output, shape index: {}]
  %s7 = sld [smem:[#allocation0]]
  $region50: #{tpu_custom_call.1} parent=0
    _
  %s9 = ssub.s32 1, %s7
  %s10 = scalar_select 0, %s9, %s7
  $region1: #{tpu_custom_call.1} parent=0
    #allocation2 [shape = 'u8[12288]{0}', space=vmem, size = 0x3000, scoped, tag = 'input window, operand 0, single buffered']
    #allocation3 [shape = 's32[1]{0}', space=sflag, size = 0x4, scoped, tag = 'scoped memory for tpu_custom_call.1']
    #allocation4 [shape = 's32[1]{0}', space=sflag, size = 0x4, scoped, tag = 'scoped memory for tpu_custom_call.1']
    #allocation5 [shape = 'u8[786432]{0}', space=vmem, size = 0xc0000, scoped, tag = 'input window, operand 1, single buffered']
    #allocation6 [shape = 's32[1]{0}', space=sflag, size = 0x4, scoped, tag = 'scoped memory for tpu_custom_call.1']
    #allocation7 [shape = 'u8[131072]{0}', space=vmem, size = 0x20000, scoped, tag = 'input window, operand 2, single buffered']
    #allocation8 [shape = 'u8[32768]{0}', space=vmem, size = 0x8000, scoped, tag = 'input window, operand 4, single buffered']
    #allocation9 [shape = 's32[1]{0}', space=sflag, size = 0x4, scoped, tag = 'scoped memory for tpu_custom_call.1']
    #allocation10 [shape = 'u8[4096]{0}', space=vmem, size = 0x1000, scoped, tag = 'output window, operand 0, single buffered']
    %11 = vsyncpa [#allocation3], 0
    %12 = vsyncpa [#allocation6], 0
    %13 = vsyncpa [#allocation9], 0
    %14 = vsyncpa [#allocation4], 0
    // Predicated region
    $region2: #{tpu_custom_call.1} parent=1 // pred_check
      _
    $region3: #{tpu_custom_call.1} parent=1 // pred_check_branch
      %16 = sbr.rel (0) target = $region5
    $region4: #{tpu_custom_call.1} parent=1 // pred_region
      %s18 = ssub.s32 384, 96
      %19 = vsyncadd [#allocation3], %s18
      %s20 = sshll.u32 [#allocation2], 4
      %s21 = int_to_ptr.vmem [resolvable:$true] %s20
      %26 = dma.hbm_to_vmem [thread:$0]  %s0, 96, %s21, [#allocation3], 96, 96, 6
    $region5: #{tpu_custom_call.1} parent=1 // pred_fallthru
      _
    // Predicated region
    $region6: #{tpu_custom_call.1} parent=1 // pred_check
      _
    $region7: #{tpu_custom_call.1} parent=1 // pred_check_branch
      %28 = sbr.rel (0) target = $region9
    $region8: #{tpu_custom_call.1} parent=1 // pred_region
      %s30 = ssub.s32 24576, 24576
      %31 = vsyncadd [#allocation6], %s30
      %s32 = sshll.u32 [#allocation5], 4
      %s33 = int_to_ptr.vmem [resolvable:$true] %s32
      %38 = dma.hbm_to_vmem [thread:$0]  %s1, 24576, %s33, [#allocation6], 256, 256, 16
    $region9: #{tpu_custom_call.1} parent=1 // pred_fallthru
      _
    // Predicated region
    $region10: #{tpu_custom_call.1} parent=1 // pred_check
      _
    $region11: #{tpu_custom_call.1} parent=1 // pred_check_branch
      %40 = sbr.rel (0) target = $region13
    $region12: #{tpu_custom_call.1} parent=1 // pred_region
      %s42 = ssub.s32 4096, 4096
      %43 = vsyncadd [#allocation6], %s42
      %s44 = sshll.u32 [#allocation7], 4
      %s45 = int_to_ptr.vmem [resolvable:$true] %s44
      %50 = dma.hbm_to_vmem [thread:$0]  %s2, 4096, %s45, [#allocation6], 64, 64, 4
    $region13: #{tpu_custom_call.1} parent=1 // pred_fallthru
      _
    // Predicated region
    $region14: #{tpu_custom_call.1} parent=1 // pred_check
      _
    $region15: #{tpu_custom_call.1} parent=1 // pred_check_branch
      %52 = sbr.rel (0) target = $region17
    $region16: #{tpu_custom_call.1} parent=1 // pred_region
      _
    $region17: #{tpu_custom_call.1} parent=1 // pred_fallthru
      _
    // Predicated region
    $region18: #{tpu_custom_call.1} parent=1 // pred_check
      _
    $region19: #{tpu_custom_call.1} parent=1 // pred_check_branch
      %54 = sbr.rel (0) target = $region21
    $region20: #{tpu_custom_call.1} parent=1 // pred_region
      %s56 = ssub.s32 1024, 1024
      %57 = vsyncadd [#allocation9], %s56
      %s58 = sshll.u32 [#allocation8], 4
      %s59 = int_to_ptr.vmem [resolvable:$true] %s58
      %64 = dma.hbm_to_vmem [thread:$0]  %s4, 1024, %s59, [#allocation9], 64, 64, 4
    $region21: #{tpu_custom_call.1} parent=1 // pred_fallthru
      _
    // Predicated region
    $region22: #{tpu_custom_call.1} parent=1 // pred_check
      _
    $region23: #{tpu_custom_call.1} parent=1 // pred_check_branch
      %66 = sbr.rel (0) target = $region25
    $region24: #{tpu_custom_call.1} parent=1 // pred_region
      _
    $region25: #{tpu_custom_call.1} parent=1 // pred_fallthru
      _
    // Predicated region
    $region26: #{tpu_custom_call.1} parent=1 // pred_check
      _
    $region27: #{tpu_custom_call.1} parent=1 // pred_check_branch
      %68 = sbr.rel (0) target = $region29
    $region28: #{tpu_custom_call.1} parent=1 // pred_region
      %69 = dma.done [#allocation3], 384
    $region29: #{tpu_custom_call.1} parent=1 // pred_fallthru
      _
    // Predicated region
    $region30: #{tpu_custom_call.1} parent=1 // pred_check
      _
    $region31: #{tpu_custom_call.1} parent=1 // pred_check_branch
      %71 = sbr.rel (0) target = $region33
    $region32: #{tpu_custom_call.1} parent=1 // pred_region
      %72 = dma.done [#allocation6], 24576
    $region33: #{tpu_custom_call.1} parent=1 // pred_fallthru
      _
    // Predicated region
    $region34: #{tpu_custom_call.1} parent=1 // pred_check
      _
    $region35: #{tpu_custom_call.1} parent=1 // pred_check_branch
      %74 = sbr.rel (0) target = $region37
    $region36: #{tpu_custom_call.1} parent=1 // pred_region
      %75 = dma.done [#allocation6], 4096
    $region37: #{tpu_custom_call.1} parent=1 // pred_fallthru
      _
    // Predicated region
    $region38: #{tpu_custom_call.1} parent=1 // pred_check
      _
    $region39: #{tpu_custom_call.1} parent=1 // pred_check_branch
      %77 = sbr.rel (0) target = $region41
    $region40: #{tpu_custom_call.1} parent=1 // pred_region
      %78 = dma.done [#allocation9], 1024
    $region41: #{tpu_custom_call.1} parent=1 // pred_fallthru
      _
    %v80 = vld [vmem:[#allocation2] sm:$0x3f]
    %v81 = vld [vmem:[#allocation2 + $0x6] sm:$0x3f]
    %v82 = vld [vmem:[#allocation2 + $0xc] sm:$0x3f]
    %v83 = vld [vmem:[#allocation2 + $0x12] sm:$0x3f]
    %v84 = vld [vmem:[#allocation5] sm:$0xff]
    %v85 = vld [vmem:[#allocation5 + $0x8] sm:$0xff]
    %v86 = vld [vmem:[#allocation5 + $0x10] sm:$0xff]
    %v87 = vld [vmem:[#allocation5 + $0x18] sm:$0xff]
    %v88 = vld [vmem:[#allocation5 + $0x20] sm:$0xff]
    %v89 = vld [vmem:[#allocation5 + $0x28] sm:$0xff]
    %v90 = vld [vmem:[#allocation5 + $0x30] sm:$0xff]
    %v91 = vld [vmem:[#allocation5 + $0x38] sm:$0xff]
    %v92 = vld [vmem:[#allocation5 + $0x40] sm:$0xff]
    %v93 = vld [vmem:[#allocation5 + $0x48] sm:$0xff]
    %v94 = vld [vmem:[#allocation5 + $0x50] sm:$0xff]
    %v95 = vld [vmem:[#allocation5 + $0x58] sm:$0xff]
    %v96 = vld [vmem:[#allocation5 + $0x60] sm:$0xff]
    %v97 = vld [vmem:[#allocation5 + $0x68] sm:$0xff]
    %v98 = vld [vmem:[#allocation5 + $0x70] sm:$0xff]
    %v99 = vld [vmem:[#allocation5 + $0x78] sm:$0xff]
    %v100 = vld [vmem:[#allocation5 + $0x80] sm:$0xff]
    %v101 = vld [vmem:[#allocation5 + $0x88] sm:$0xff]
    %v102 = vld [vmem:[#allocation5 + $0x90] sm:$0xff]
    %v103 = vld [vmem:[#allocation5 + $0x98] sm:$0xff]
    %v104 = vld [vmem:[#allocation5 + $0xa0] sm:$0xff]
    %v105 = vld [vmem:[#allocation5 + $0xa8] sm:$0xff]
    %v106 = vld [vmem:[#allocation5 + $0xb0] sm:$0xff]
    %v107 = vld [vmem:[#allocation5 + $0xb8] sm:$0xff]
    %v108 = vld [vmem:[#allocation5 + $0xc0] sm:$0xff]
    %v109 = vld [vmem:[#allocation5 + $0xc8] sm:$0xff]
    %v110 = vld [vmem:[#allocation5 + $0xd0] sm:$0xff]
    %v111 = vld [vmem:[#allocation5 + $0xd8] sm:$0xff]
    %v112 = vld [vmem:[#allocation5 + $0xe0] sm:$0xff]
    %v113 = vld [vmem:[#allocation5 + $0xe8] sm:$0xff]
    %v114 = vld [vmem:[#allocation5 + $0xf0] sm:$0xff]
    %v115 = vld [vmem:[#allocation5 + $0xf8] sm:$0xff]
    %v116 = vld [vmem:[#allocation5 + $0x100] sm:$0xff]
    %v117 = vld [vmem:[#allocation5 + $0x108] sm:$0xff]
    %v118 = vld [vmem:[#allocation5 + $0x110] sm:$0xff]
    %v119 = vld [vmem:[#allocation5 + $0x118] sm:$0xff]
    %v120 = vld [vmem:[#allocation5 + $0x120] sm:$0xff]
    %v121 = vld [vmem:[#allocation5 + $0x128] sm:$0xff]
    %v122 = vld [vmem:[#allocation5 + $0x130] sm:$0xff]
    %v123 = vld [vmem:[#allocation5 + $0x138] sm:$0xff]
    %v124 = vld [vmem:[#allocation5 + $0x140] sm:$0xff]
    %v125 = vld [vmem:[#allocation5 + $0x148] sm:$0xff]
    %v126 = vld [vmem:[#allocation5 + $0x150] sm:$0xff]
    %v127 = vld [vmem:[#allocation5 + $0x158] sm:$0xff]
    %v128 = vld [vmem:[#allocation5 + $0x160] sm:$0xff]
    %v129 = vld [vmem:[#allocation5 + $0x168] sm:$0xff]
    %v130 = vld [vmem:[#allocation5 + $0x170] sm:$0xff]
    %v131 = vld [vmem:[#allocation5 + $0x178] sm:$0xff]
    %v132 = vld [vmem:[#allocation5 + $0x180] sm:$0xff]
    %v133 = vld [vmem:[#allocation5 + $0x188] sm:$0xff]
    %v134 = vld [vmem:[#allocation5 + $0x190] sm:$0xff]
    %v135 = vld [vmem:[#allocation5 + $0x198] sm:$0xff]
    %v136 = vld [vmem:[#allocation5 + $0x1a0] sm:$0xff]
    %v137 = vld [vmem:[#allocation5 + $0x1a8] sm:$0xff]
    %v138 = vld [vmem:[#allocation5 + $0x1b0] sm:$0xff]
    %v139 = vld [vmem:[#allocation5 + $0x1b8] sm:$0xff]
    %v140 = vld [vmem:[#allocation5 + $0x1c0] sm:$0xff]
    %v141 = vld [vmem:[#allocation5 + $0x1c8] sm:$0xff]
    %v142 = vld [vmem:[#allocation5 + $0x1d0] sm:$0xff]
    %v143 = vld [vmem:[#allocation5 + $0x1d8] sm:$0xff]
    %v144 = vld [vmem:[#allocation5 + $0x1e0] sm:$0xff]
    %v145 = vld [vmem:[#allocation5 + $0x1e8] sm:$0xff]
    %v146 = vld [vmem:[#allocation5 + $0x1f0] sm:$0xff]
    %v147 = vld [vmem:[#allocation5 + $0x1f8] sm:$0xff]
    %v148 = vld [vmem:[#allocation5 + $0x200] sm:$0xff]
    %v149 = vld [vmem:[#allocation5 + $0x208] sm:$0xff]
    %v150 = vld [vmem:[#allocation5 + $0x210] sm:$0xff]
    %v151 = vld [vmem:[#allocation5 + $0x218] sm:$0xff]
    %v152 = vld [vmem:[#allocation5 + $0x220] sm:$0xff]
    %v153 = vld [vmem:[#allocation5 + $0x228] sm:$0xff]
    %v154 = vld [vmem:[#allocation5 + $0x230] sm:$0xff]
    %v155 = vld [vmem:[#allocation5 + $0x238] sm:$0xff]
    %v156 = vld [vmem:[#allocation5 + $0x240] sm:$0xff]
    %v157 = vld [vmem:[#allocation5 + $0x248] sm:$0xff]
    %v158 = vld [vmem:[#allocation5 + $0x250] sm:$0xff]
    %v159 = vld [vmem:[#allocation5 + $0x258] sm:$0xff]
    %v160 = vld [vmem:[#allocation5 + $0x260] sm:$0xff]
    %v161 = vld [vmem:[#allocation5 + $0x268] sm:$0xff]
    %v162 = vld [vmem:[#allocation5 + $0x270] sm:$0xff]
    %v163 = vld [vmem:[#allocation5 + $0x278] sm:$0xff]
    %v164 = vld [vmem:[#allocation5 + $0x280] sm:$0xff]
    %v165 = vld [vmem:[#allocation5 + $0x288] sm:$0xff]
    %v166 = vld [vmem:[#allocation5 + $0x290] sm:$0xff]
    %v167 = vld [vmem:[#allocation5 + $0x298] sm:$0xff]
    %v168 = vld [vmem:[#allocation5 + $0x2a0] sm:$0xff]
    %v169 = vld [vmem:[#allocation5 + $0x2a8] sm:$0xff]
    %v170 = vld [vmem:[#allocation5 + $0x2b0] sm:$0xff]
    %v171 = vld [vmem:[#allocation5 + $0x2b8] sm:$0xff]
    %v172 = vld [vmem:[#allocation5 + $0x2c0] sm:$0xff]
    %v173 = vld [vmem:[#allocation5 + $0x2c8] sm:$0xff]
    %v174 = vld [vmem:[#allocation5 + $0x2d0] sm:$0xff]
    %v175 = vld [vmem:[#allocation5 + $0x2d8] sm:$0xff]
    %v176 = vld [vmem:[#allocation5 + $0x2e0] sm:$0xff]
    %v177 = vld [vmem:[#allocation5 + $0x2e8] sm:$0xff]
    %v178 = vld [vmem:[#allocation5 + $0x2f0] sm:$0xff]
    %v179 = vld [vmem:[#allocation5 + $0x2f8] sm:$0xff]
    %v180 = vld [vmem:[#allocation5 + $0x300] sm:$0xff]
    %v181 = vld [vmem:[#allocation5 + $0x308] sm:$0xff]
    %v182 = vld [vmem:[#allocation5 + $0x310] sm:$0xff]
    %v183 = vld [vmem:[#allocation5 + $0x318] sm:$0xff]
    %v184 = vld [vmem:[#allocation5 + $0x320] sm:$0xff]
    %v185 = vld [vmem:[#allocation5 + $0x328] sm:$0xff]
    %v186 = vld [vmem:[#allocation5 + $0x330] sm:$0xff]
    %v187 = vld [vmem:[#allocation5 + $0x338] sm:$0xff]
    %v188 = vld [vmem:[#allocation5 + $0x340] sm:$0xff]
    %v189 = vld [vmem:[#allocation5 + $0x348] sm:$0xff]
    %v190 = vld [vmem:[#allocation5 + $0x350] sm:$0xff]
    %v191 = vld [vmem:[#allocation5 + $0x358] sm:$0xff]
    %v192 = vld [vmem:[#allocation5 + $0x360] sm:$0xff]
    %v193 = vld [vmem:[#allocation5 + $0x368] sm:$0xff]
    %v194 = vld [vmem:[#allocation5 + $0x370] sm:$0xff]
    %v195 = vld [vmem:[#allocation5 + $0x378] sm:$0xff]
    %v196 = vld [vmem:[#allocation5 + $0x380] sm:$0xff]
    %v197 = vld [vmem:[#allocation5 + $0x388] sm:$0xff]
    %v198 = vld [vmem:[#allocation5 + $0x390] sm:$0xff]
    %v199 = vld [vmem:[#allocation5 + $0x398] sm:$0xff]
    %v200 = vld [vmem:[#allocation5 + $0x3a0] sm:$0xff]
    %v201 = vld [vmem:[#allocation5 + $0x3a8] sm:$0xff]
    %v202 = vld [vmem:[#allocation5 + $0x3b0] sm:$0xff]
    %v203 = vld [vmem:[#allocation5 + $0x3b8] sm:$0xff]
    %v204 = vld [vmem:[#allocation5 + $0x3c0] sm:$0xff]
    %v205 = vld [vmem:[#allocation5 + $0x3c8] sm:$0xff]
    %v206 = vld [vmem:[#allocation5 + $0x3d0] sm:$0xff]
    %v207 = vld [vmem:[#allocation5 + $0x3d8] sm:$0xff]
    %v208 = vld [vmem:[#allocation5 + $0x3e0] sm:$0xff]
    %v209 = vld [vmem:[#allocation5 + $0x3e8] sm:$0xff]
    %v210 = vld [vmem:[#allocation5 + $0x3f0] sm:$0xff]
    %v211 = vld [vmem:[#allocation5 + $0x3f8] sm:$0xff]
    %v212 = vld [vmem:[#allocation5 + $0x400] sm:$0xff]
    %v213 = vld [vmem:[#allocation5 + $0x408] sm:$0xff]
    %v214 = vld [vmem:[#allocation5 + $0x410] sm:$0xff]
    %v215 = vld [vmem:[#allocation5 + $0x418] sm:$0xff]
    %v216 = vld [vmem:[#allocation5 + $0x420] sm:$0xff]
    %v217 = vld [vmem:[#allocation5 + $0x428] sm:$0xff]
    %v218 = vld [vmem:[#allocation5 + $0x430] sm:$0xff]
    %v219 = vld [vmem:[#allocation5 + $0x438] sm:$0xff]
    %v220 = vld [vmem:[#allocation5 + $0x440] sm:$0xff]
    %v221 = vld [vmem:[#allocation5 + $0x448] sm:$0xff]
    %v222 = vld [vmem:[#allocation5 + $0x450] sm:$0xff]
    %v223 = vld [vmem:[#allocation5 + $0x458] sm:$0xff]
    %v224 = vld [vmem:[#allocation5 + $0x460] sm:$0xff]
    %v225 = vld [vmem:[#allocation5 + $0x468] sm:$0xff]
    %v226 = vld [vmem:[#allocation5 + $0x470] sm:$0xff]
    %v227 = vld [vmem:[#allocation5 + $0x478] sm:$0xff]
    %v228 = vld [vmem:[#allocation5 + $0x480] sm:$0xff]
    %v229 = vld [vmem:[#allocation5 + $0x488] sm:$0xff]
    %v230 = vld [vmem:[#allocation5 + $0x490] sm:$0xff]
    %v231 = vld [vmem:[#allocation5 + $0x498] sm:$0xff]
    %v232 = vld [vmem:[#allocation5 + $0x4a0] sm:$0xff]
    %v233 = vld [vmem:[#allocation5 + $0x4a8] sm:$0xff]
    %v234 = vld [vmem:[#allocation5 + $0x4b0] sm:$0xff]
    %v235 = vld [vmem:[#allocation5 + $0x4b8] sm:$0xff]
    %v236 = vld [vmem:[#allocation5 + $0x4c0] sm:$0xff]
    %v237 = vld [vmem:[#allocation5 + $0x4c8] sm:$0xff]
    %v238 = vld [vmem:[#allocation5 + $0x4d0] sm:$0xff]
    %v239 = vld [vmem:[#allocation5 + $0x4d8] sm:$0xff]
    %v240 = vld [vmem:[#allocation5 + $0x4e0] sm:$0xff]
    %v241 = vld [vmem:[#allocation5 + $0x4e8] sm:$0xff]
    %v242 = vld [vmem:[#allocation5 + $0x4f0] sm:$0xff]
    %v243 = vld [vmem:[#allocation5 + $0x4f8] sm:$0xff]
    %v244 = vld [vmem:[#allocation5 + $0x500] sm:$0xff]
    %v245 = vld [vmem:[#allocation5 + $0x508] sm:$0xff]
    %v246 = vld [vmem:[#allocation5 + $0x510] sm:$0xff]
    %v247 = vld [vmem:[#allocation5 + $0x518] sm:$0xff]
    %v248 = vld [vmem:[#allocation5 + $0x520] sm:$0xff]
    %v249 = vld [vmem:[#allocation5 + $0x528] sm:$0xff]
    %v250 = vld [vmem:[#allocation5 + $0x530] sm:$0xff]
    %v251 = vld [vmem:[#allocation5 + $0x538] sm:$0xff]
    %v252 = vld [vmem:[#allocation5 + $0x540] sm:$0xff]
    %v253 = vld [vmem:[#allocation5 + $0x548] sm:$0xff]
    %v254 = vld [vmem:[#allocation5 + $0x550] sm:$0xff]
    %v255 = vld [vmem:[#allocation5 + $0x558] sm:$0xff]
    %v256 = vld [vmem:[#allocation5 + $0x560] sm:$0xff]
    %v257 = vld [vmem:[#allocation5 + $0x568] sm:$0xff]
    %v258 = vld [vmem:[#allocation5 + $0x570] sm:$0xff]
    %v259 = vld [vmem:[#allocation5 + $0x578] sm:$0xff]
    %v260 = vld [vmem:[#allocation5 + $0x580] sm:$0xff]
    %v261 = vld [vmem:[#allocation5 + $0x588] sm:$0xff]
    %v262 = vld [vmem:[#allocation5 + $0x590] sm:$0xff]
    %v263 = vld [vmem:[#allocation5 + $0x598] sm:$0xff]
    %v264 = vld [vmem:[#allocation5 + $0x5a0] sm:$0xff]
    %v265 = vld [vmem:[#allocation5 + $0x5a8] sm:$0xff]
    %v266 = vld [vmem:[#allocation5 + $0x5b0] sm:$0xff]
    %v267 = vld [vmem:[#allocation5 + $0x5b8] sm:$0xff]
    %v268 = vld [vmem:[#allocation5 + $0x5c0] sm:$0xff]
    %v269 = vld [vmem:[#allocation5 + $0x5c8] sm:$0xff]
    %v270 = vld [vmem:[#allocation5 + $0x5d0] sm:$0xff]
    %v271 = vld [vmem:[#allocation5 + $0x5d8] sm:$0xff]
    %v272 = vld [vmem:[#allocation5 + $0x5e0] sm:$0xff]
    %v273 = vld [vmem:[#allocation5 + $0x5e8] sm:$0xff]
    %v274 = vld [vmem:[#allocation5 + $0x5f0] sm:$0xff]
    %v275 = vld [vmem:[#allocation5 + $0x5f8] sm:$0xff]
    %v280 = vcombine.low %v80, %v81
    %v281 = vcombine.high %v80, %v81
    %v282 = vcombine.low %v82, %v83
    %v283 = vcombine.high %v82, %v83
    %v285 = vunpack.c.l.s4 1966171168
    %v286 = vunpack.c.0.s8 %v285
    %v287 = vlaneseq
    %v288 = vshrl.u32 %v287, 7
    %v289 = vsub.s32 %v286, %v288
    %v290 = vrot.slane %v280, %v289
    %v292 = vunpack.c.l.s4 1966171168
    %v293 = vunpack.c.0.s8 %v292
    %v294 = vlaneseq
    %v295 = vshrl.u32 %v294, 7
    %v296 = vsub.s32 %v293, %v295
    %v297 = vrot.slane %v281, %v296
    %v299 = vunpack.c.l.s4 1966171168
    %v300 = vunpack.c.0.s8 %v299
    %v301 = vlaneseq
    %v302 = vshrl.u32 %v301, 7
    %v303 = vsub.s32 %v300, %v302
    %v304 = vrot.slane %v282, %v303
    %v306 = vunpack.c.l.s4 1966171168
    %v307 = vunpack.c.0.s8 %v306
    %v308 = vlaneseq
    %v309 = vshrl.u32 %v308, 7
    %v310 = vsub.s32 %v307, %v309
    %v311 = vrot.slane %v283, %v310
    %v312 = vcombine.low %v290, %v304
    %v313 = vcombine.high %v290, %v304
    %v314 = vcombine.low %v297, %v311
    %v315 = vcombine.high %v297, %v311
    %v317 = vunpack.c.l.s4 1966171168
    %v318 = vunpack.c.0.s8 %v317
    %v319 = vlaneseq
    %v320 = vshrl.u32 %v319, 7
    %v321 = vsub.s32 %v318, %v320
    %v322 = vrot.slane %v312, %v321
    %v324 = vunpack.c.l.s4 1966171168
    %v325 = vunpack.c.0.s8 %v324
    %v326 = vlaneseq
    %v327 = vshrl.u32 %v326, 7
    %v328 = vsub.s32 %v325, %v327
    %v329 = vrot.slane %v314, %v328
    %v331 = vunpack.c.l.s4 1966171168
    %v332 = vunpack.c.0.s8 %v331
    %v333 = vlaneseq
    %v334 = vshrl.u32 %v333, 7
    %v335 = vsub.s32 %v332, %v334
    %v336 = vrot.slane %v313, %v335
    %v338 = vunpack.c.l.s4 1966171168
    %v339 = vunpack.c.0.s8 %v338
    %v340 = vlaneseq
    %v341 = vshrl.u32 %v340, 7
    %v342 = vsub.s32 %v339, %v341
    %v343 = vrot.slane %v315, %v342
    %v344 = vcombine.high %v322, %v322
    %v345 = vcombine.high %v336, %v336
    %v544 = vunpack.c.l.b16 %v84
    %v545 = vunpack.c.h.b16 %v84
    %v546 = vunpack.c.l.b16 %v85
    %v547 = vunpack.c.h.b16 %v85
    %v548 = vunpack.c.l.b16 %v86
    %v549 = vunpack.c.h.b16 %v86
    %v550 = vunpack.c.l.b16 %v87
    %v551 = vunpack.c.h.b16 %v87
    %v552 = vunpack.c.l.b16 %v88
    %v553 = vunpack.c.h.b16 %v88
    %v554 = vunpack.c.l.b16 %v89
    %v555 = vunpack.c.h.b16 %v89
    %v556 = vunpack.c.l.b16 %v90
    %v557 = vunpack.c.h.b16 %v90
    %v558 = vunpack.c.l.b16 %v91
    %v559 = vunpack.c.h.b16 %v91
    %v560 = vunpack.c.l.b16 %v92
    %v561 = vunpack.c.h.b16 %v92
    %v562 = vunpack.c.l.b16 %v93
    %v563 = vunpack.c.h.b16 %v93
    %v564 = vunpack.c.l.b16 %v94
    %v565 = vunpack.c.h.b16 %v94
    %v566 = vunpack.c.l.b16 %v95
    %v567 = vunpack.c.h.b16 %v95
    %v568 = vunpack.c.l.b16 %v96
    %v569 = vunpack.c.h.b16 %v96
    %v570 = vunpack.c.l.b16 %v97
    %v571 = vunpack.c.h.b16 %v97
    %v572 = vunpack.c.l.b16 %v98
    %v573 = vunpack.c.h.b16 %v98
    %v574 = vunpack.c.l.b16 %v99
    %v575 = vunpack.c.h.b16 %v99
    %v576 = vunpack.c.l.b16 %v100
    %v577 = vunpack.c.h.b16 %v100
    %v578 = vunpack.c.l.b16 %v101
    %v579 = vunpack.c.h.b16 %v101
    %v580 = vunpack.c.l.b16 %v102
    %v581 = vunpack.c.h.b16 %v102
    %v582 = vunpack.c.l.b16 %v103
    %v583 = vunpack.c.h.b16 %v103
    %v584 = vunpack.c.l.b16 %v104
    %v585 = vunpack.c.h.b16 %v104
    %v586 = vunpack.c.l.b16 %v105
    %v587 = vunpack.c.h.b16 %v105
    %v588 = vunpack.c.l.b16 %v106
    %v589 = vunpack.c.h.b16 %v106
    %v590 = vunpack.c.l.b16 %v107
    %v591 = vunpack.c.h.b16 %v107
    %v592 = vunpack.c.l.b16 %v108
    %v593 = vunpack.c.h.b16 %v108
    %v594 = vunpack.c.l.b16 %v109
    %v595 = vunpack.c.h.b16 %v109
    %v596 = vunpack.c.l.b16 %v110
    %v597 = vunpack.c.h.b16 %v110
    %v598 = vunpack.c.l.b16 %v111
    %v599 = vunpack.c.h.b16 %v111
    %v600 = vunpack.c.l.b16 %v112
    %v601 = vunpack.c.h.b16 %v112
    %v602 = vunpack.c.l.b16 %v113
    %v603 = vunpack.c.h.b16 %v113
    %v604 = vunpack.c.l.b16 %v114
    %v605 = vunpack.c.h.b16 %v114
    %v606 = vunpack.c.l.b16 %v115
    %v607 = vunpack.c.h.b16 %v115
    %v608 = vunpack.c.l.b16 %v116
    %v609 = vunpack.c.h.b16 %v116
    %v610 = vunpack.c.l.b16 %v117
    %v611 = vunpack.c.h.b16 %v117
    %v612 = vunpack.c.l.b16 %v118
    %v613 = vunpack.c.h.b16 %v118
    %v614 = vunpack.c.l.b16 %v119
    %v615 = vunpack.c.h.b16 %v119
    %v616 = vunpack.c.l.b16 %v120
    %v617 = vunpack.c.h.b16 %v120
    %v618 = vunpack.c.l.b16 %v121
    %v619 = vunpack.c.h.b16 %v121
    %v620 = vunpack.c.l.b16 %v122
    %v621 = vunpack.c.h.b16 %v122
    %v622 = vunpack.c.l.b16 %v123
    %v623 = vunpack.c.h.b16 %v123
    %v624 = vunpack.c.l.b16 %v124
    %v625 = vunpack.c.h.b16 %v124
    %v626 = vunpack.c.l.b16 %v125
    %v627 = vunpack.c.h.b16 %v125
    %v628 = vunpack.c.l.b16 %v126
    %v629 = vunpack.c.h.b16 %v126
    %v630 = vunpack.c.l.b16 %v127
    %v631 = vunpack.c.h.b16 %v127
    %v632 = vunpack.c.l.b16 %v128
    %v633 = vunpack.c.h.b16 %v128
    %v634 = vunpack.c.l.b16 %v129
    %v635 = vunpack.c.h.b16 %v129
    %v636 = vunpack.c.l.b16 %v130
    %v637 = vunpack.c.h.b16 %v130
    %v638 = vunpack.c.l.b16 %v131
    %v639 = vunpack.c.h.b16 %v131
    %v640 = vunpack.c.l.b16 %v132
    %v641 = vunpack.c.h.b16 %v132
    %v642 = vunpack.c.l.b16 %v133
    %v643 = vunpack.c.h.b16 %v133
    %v644 = vunpack.c.l.b16 %v134
    %v645 = vunpack.c.h.b16 %v134
    %v646 = vunpack.c.l.b16 %v135
    %v647 = vunpack.c.h.b16 %v135
    %v648 = vunpack.c.l.b16 %v136
    %v649 = vunpack.c.h.b16 %v136
    %v650 = vunpack.c.l.b16 %v137
    %v651 = vunpack.c.h.b16 %v137
    %v652 = vunpack.c.l.b16 %v138
    %v653 = vunpack.c.h.b16 %v138
    %v654 = vunpack.c.l.b16 %v139
    %v655 = vunpack.c.h.b16 %v139
    %v656 = vunpack.c.l.b16 %v140
    %v657 = vunpack.c.h.b16 %v140
    %v658 = vunpack.c.l.b16 %v141
    %v659 = vunpack.c.h.b16 %v141
    %v660 = vunpack.c.l.b16 %v142
    %v661 = vunpack.c.h.b16 %v142
    %v662 = vunpack.c.l.b16 %v143
    %v663 = vunpack.c.h.b16 %v143
    %v664 = vunpack.c.l.b16 %v144
    %v665 = vunpack.c.h.b16 %v144
    %v666 = vunpack.c.l.b16 %v145
    %v667 = vunpack.c.h.b16 %v145
    %v668 = vunpack.c.l.b16 %v146
    %v669 = vunpack.c.h.b16 %v146
    %v670 = vunpack.c.l.b16 %v147
    %v671 = vunpack.c.h.b16 %v147
    %v672 = vunpack.c.l.b16 %v148
    %v673 = vunpack.c.h.b16 %v148
    %v674 = vunpack.c.l.b16 %v149
    %v675 = vunpack.c.h.b16 %v149
    %v676 = vunpack.c.l.b16 %v150
    %v677 = vunpack.c.h.b16 %v150
    %v678 = vunpack.c.l.b16 %v151
    %v679 = vunpack.c.h.b16 %v151
    %v680 = vunpack.c.l.b16 %v152
    %v681 = vunpack.c.h.b16 %v152
    %v682 = vunpack.c.l.b16 %v153
    %v683 = vunpack.c.h.b16 %v153
    %v684 = vunpack.c.l.b16 %v154
    %v685 = vunpack.c.h.b16 %v154
    %v686 = vunpack.c.l.b16 %v155
    %v687 = vunpack.c.h.b16 %v155
    %v688 = vunpack.c.l.b16 %v156
    %v689 = vunpack.c.h.b16 %v156
    %v690 = vunpack.c.l.b16 %v157
    %v691 = vunpack.c.h.b16 %v157
    %v692 = vunpack.c.l.b16 %v158
    %v693 = vunpack.c.h.b16 %v158
    %v694 = vunpack.c.l.b16 %v159
    %v695 = vunpack.c.h.b16 %v159
    %v696 = vunpack.c.l.b16 %v160
    %v697 = vunpack.c.h.b16 %v160
    %v698 = vunpack.c.l.b16 %v161
    %v699 = vunpack.c.h.b16 %v161
    %v700 = vunpack.c.l.b16 %v162
    %v701 = vunpack.c.h.b16 %v162
    %v702 = vunpack.c.l.b16 %v163
    %v703 = vunpack.c.h.b16 %v163
    %v704 = vunpack.c.l.b16 %v164
    %v705 = vunpack.c.h.b16 %v164
    %v706 = vunpack.c.l.b16 %v165
    %v707 = vunpack.c.h.b16 %v165
    %v708 = vunpack.c.l.b16 %v166
    %v709 = vunpack.c.h.b16 %v166
    %v710 = vunpack.c.l.b16 %v167
    %v711 = vunpack.c.h.b16 %v167
    %v712 = vunpack.c.l.b16 %v168
    %v713 = vunpack.c.h.b16 %v168
    %v714 = vunpack.c.l.b16 %v169
    %v715 = vunpack.c.h.b16 %v169
    %v716 = vunpack.c.l.b16 %v170
    %v717 = vunpack.c.h.b16 %v170
    %v718 = vunpack.c.l.b16 %v171
    %v719 = vunpack.c.h.b16 %v171
    %v720 = vunpack.c.l.b16 %v172
    %v721 = vunpack.c.h.b16 %v172
    %v722 = vunpack.c.l.b16 %v173
    %v723 = vunpack.c.h.b16 %v173
    %v724 = vunpack.c.l.b16 %v174
    %v725 = vunpack.c.h.b16 %v174
    %v726 = vunpack.c.l.b16 %v175
    %v727 = vunpack.c.h.b16 %v175
    %v728 = vunpack.c.l.b16 %v176
    %v729 = vunpack.c.h.b16 %v176
    %v730 = vunpack.c.l.b16 %v177
    %v731 = vunpack.c.h.b16 %v177
    %v732 = vunpack.c.l.b16 %v178
    %v733 = vunpack.c.h.b16 %v178
    %v734 = vunpack.c.l.b16 %v179
    %v735 = vunpack.c.h.b16 %v179
    %v736 = vunpack.c.l.b16 %v180
    %v737 = vunpack.c.h.b16 %v180
    %v738 = vunpack.c.l.b16 %v181
    %v739 = vunpack.c.h.b16 %v181
    %v740 = vunpack.c.l.b16 %v182
    %v741 = vunpack.c.h.b16 %v182
    %v742 = vunpack.c.l.b16 %v183
    %v743 = vunpack.c.h.b16 %v183
    %v744 = vunpack.c.l.b16 %v184
    %v745 = vunpack.c.h.b16 %v184
    %v746 = vunpack.c.l.b16 %v185
    %v747 = vunpack.c.h.b16 %v185
    %v748 = vunpack.c.l.b16 %v186
    %v749 = vunpack.c.h.b16 %v186
    %v750 = vunpack.c.l.b16 %v187
    %v751 = vunpack.c.h.b16 %v187
    %v752 = vunpack.c.l.b16 %v188
    %v753 = vunpack.c.h.b16 %v188
    %v754 = vunpack.c.l.b16 %v189
    %v755 = vunpack.c.h.b16 %v189
    %v756 = vunpack.c.l.b16 %v190
    %v757 = vunpack.c.h.b16 %v190
    %v758 = vunpack.c.l.b16 %v191
    %v759 = vunpack.c.h.b16 %v191
    %v760 = vunpack.c.l.b16 %v192
    %v761 = vunpack.c.h.b16 %v192
    %v762 = vunpack.c.l.b16 %v193
    %v763 = vunpack.c.h.b16 %v193
    %v764 = vunpack.c.l.b16 %v194
    %v765 = vunpack.c.h.b16 %v194
    %v766 = vunpack.c.l.b16 %v195
    %v767 = vunpack.c.h.b16 %v195
    %v768 = vunpack.c.l.b16 %v196
    %v769 = vunpack.c.h.b16 %v196
    %v770 = vunpack.c.l.b16 %v197
    %v771 = vunpack.c.h.b16 %v197
    %v772 = vunpack.c.l.b16 %v198
    %v773 = vunpack.c.h.b16 %v198
    %v774 = vunpack.c.l.b16 %v199
    %v775 = vunpack.c.h.b16 %v199
    %v776 = vunpack.c.l.b16 %v200
    %v777 = vunpack.c.h.b16 %v200
    %v778 = vunpack.c.l.b16 %v201
    %v779 = vunpack.c.h.b16 %v201
    %v780 = vunpack.c.l.b16 %v202
    %v781 = vunpack.c.h.b16 %v202
    %v782 = vunpack.c.l.b16 %v203
    %v783 = vunpack.c.h.b16 %v203
    %v784 = vunpack.c.l.b16 %v204
    %v785 = vunpack.c.h.b16 %v204
    %v786 = vunpack.c.l.b16 %v205
    %v787 = vunpack.c.h.b16 %v205
    %v788 = vunpack.c.l.b16 %v206
    %v789 = vunpack.c.h.b16 %v206
    %v790 = vunpack.c.l.b16 %v207
    %v791 = vunpack.c.h.b16 %v207
    %v792 = vunpack.c.l.b16 %v208
    %v793 = vunpack.c.h.b16 %v208
    %v794 = vunpack.c.l.b16 %v209
    %v795 = vunpack.c.h.b16 %v209
    %v796 = vunpack.c.l.b16 %v210
    %v797 = vunpack.c.h.b16 %v210
    %v798 = vunpack.c.l.b16 %v211
    %v799 = vunpack.c.h.b16 %v211
    %v800 = vunpack.c.l.b16 %v212
    %v801 = vunpack.c.h.b16 %v212
    %v802 = vunpack.c.l.b16 %v213
    %v803 = vunpack.c.h.b16 %v213
    %v804 = vunpack.c.l.b16 %v214
    %v805 = vunpack.c.h.b16 %v214
    %v806 = vunpack.c.l.b16 %v215
    %v807 = vunpack.c.h.b16 %v215
    %v808 = vunpack.c.l.b16 %v216
    %v809 = vunpack.c.h.b16 %v216
    %v810 = vunpack.c.l.b16 %v217
    %v811 = vunpack.c.h.b16 %v217
    %v812 = vunpack.c.l.b16 %v218
    %v813 = vunpack.c.h.b16 %v218
    %v814 = vunpack.c.l.b16 %v219
    %v815 = vunpack.c.h.b16 %v219
    %v816 = vunpack.c.l.b16 %v220
    %v817 = vunpack.c.h.b16 %v220
    %v818 = vunpack.c.l.b16 %v221
    %v819 = vunpack.c.h.b16 %v221
    %v820 = vunpack.c.l.b16 %v222
    %v821 = vunpack.c.h.b16 %v222
    %v822 = vunpack.c.l.b16 %v223
    %v823 = vunpack.c.h.b16 %v223
    %v824 = vunpack.c.l.b16 %v224
    %v825 = vunpack.c.h.b16 %v224
    %v826 = vunpack.c.l.b16 %v225
    %v827 = vunpack.c.h.b16 %v225
    %v828 = vunpack.c.l.b16 %v226
    %v829 = vunpack.c.h.b16 %v226
    %v830 = vunpack.c.l.b16 %v227
    %v831 = vunpack.c.h.b16 %v227
    %v832 = vunpack.c.l.b16 %v228
    %v833 = vunpack.c.h.b16 %v228
    %v834 = vunpack.c.l.b16 %v229
    %v835 = vunpack.c.h.b16 %v229
    %v836 = vunpack.c.l.b16 %v230
    %v837 = vunpack.c.h.b16 %v230
    %v838 = vunpack.c.l.b16 %v231
    %v839 = vunpack.c.h.b16 %v231
    %v840 = vunpack.c.l.b16 %v232
    %v841 = vunpack.c.h.b16 %v232
    %v842 = vunpack.c.l.b16 %v233
    %v843 = vunpack.c.h.b16 %v233
    %v844 = vunpack.c.l.b16 %v234
    %v845 = vunpack.c.h.b16 %v234
    %v846 = vunpack.c.l.b16 %v235
    %v847 = vunpack.c.h.b16 %v235
    %v848 = vunpack.c.l.b16 %v236
    %v849 = vunpack.c.h.b16 %v236
    %v850 = vunpack.c.l.b16 %v237
    %v851 = vunpack.c.h.b16 %v237
    %v852 = vunpack.c.l.b16 %v238
    %v853 = vunpack.c.h.b16 %v238
    %v854 = vunpack.c.l.b16 %v239
    %v855 = vunpack.c.h.b16 %v239
    %v856 = vunpack.c.l.b16 %v240
    %v857 = vunpack.c.h.b16 %v240
    %v858 = vunpack.c.l.b16 %v241
    %v859 = vunpack.c.h.b16 %v241
    %v860 = vunpack.c.l.b16 %v242
    %v861 = vunpack.c.h.b16 %v242
    %v862 = vunpack.c.l.b16 %v243
    %v863 = vunpack.c.h.b16 %v243
    %v864 = vunpack.c.l.b16 %v244
    %v865 = vunpack.c.h.b16 %v244
    %v866 = vunpack.c.l.b16 %v245
    %v867 = vunpack.c.h.b16 %v245
    %v868 = vunpack.c.l.b16 %v246
    %v869 = vunpack.c.h.b16 %v246
    %v870 = vunpack.c.l.b16 %v247
    %v871 = vunpack.c.h.b16 %v247
    %v872 = vunpack.c.l.b16 %v248
    %v873 = vunpack.c.h.b16 %v248
    %v874 = vunpack.c.l.b16 %v249
    %v875 = vunpack.c.h.b16 %v249
    %v876 = vunpack.c.l.b16 %v250
    %v877 = vunpack.c.h.b16 %v250
    %v878 = vunpack.c.l.b16 %v251
    %v879 = vunpack.c.h.b16 %v251
    %v880 = vunpack.c.l.b16 %v252
    %v881 = vunpack.c.h.b16 %v252
    %v882 = vunpack.c.l.b16 %v253
    %v883 = vunpack.c.h.b16 %v253
    %v884 = vunpack.c.l.b16 %v254
    %v885 = vunpack.c.h.b16 %v254
    %v886 = vunpack.c.l.b16 %v255
    %v887 = vunpack.c.h.b16 %v255
    %v888 = vunpack.c.l.b16 %v256
    %v889 = vunpack.c.h.b16 %v256
    %v890 = vunpack.c.l.b16 %v257
    %v891 = vunpack.c.h.b16 %v257
    %v892 = vunpack.c.l.b16 %v258
    %v893 = vunpack.c.h.b16 %v258
    %v894 = vunpack.c.l.b16 %v259
    %v895 = vunpack.c.h.b16 %v259
    %v896 = vunpack.c.l.b16 %v260
    %v897 = vunpack.c.h.b16 %v260
    %v898 = vunpack.c.l.b16 %v261
    %v899 = vunpack.c.h.b16 %v261
    %v900 = vunpack.c.l.b16 %v262
    %v901 = vunpack.c.h.b16 %v262
    %v902 = vunpack.c.l.b16 %v263
    %v903 = vunpack.c.h.b16 %v263
    %v904 = vunpack.c.l.b16 %v264
    %v905 = vunpack.c.h.b16 %v264
    %v906 = vunpack.c.l.b16 %v265
    %v907 = vunpack.c.h.b16 %v265
    %v908 = vunpack.c.l.b16 %v266
    %v909 = vunpack.c.h.b16 %v266
    %v910 = vunpack.c.l.b16 %v267
    %v911 = vunpack.c.h.b16 %v267
    %v912 = vunpack.c.l.b16 %v268
    %v913 = vunpack.c.h.b16 %v268
    %v914 = vunpack.c.l.b16 %v269
    %v915 = vunpack.c.h.b16 %v269
    %v916 = vunpack.c.l.b16 %v270
    %v917 = vunpack.c.h.b16 %v270
    %v918 = vunpack.c.l.b16 %v271
    %v919 = vunpack.c.h.b16 %v271
    %v920 = vunpack.c.l.b16 %v272
    %v921 = vunpack.c.h.b16 %v272
    %v922 = vunpack.c.l.b16 %v273
    %v923 = vunpack.c.h.b16 %v273
    %v924 = vunpack.c.l.b16 %v274
    %v925 = vunpack.c.h.b16 %v274
    %v926 = vunpack.c.l.b16 %v275
    %v927 = vunpack.c.h.b16 %v275
    %v928 = vpack.c.b16 %v548, %v544
    %v929 = vpack.c.b16 %v549, %v545
    %v930 = vpack.c.b16 %v550, %v546
    %v931 = vpack.c.b16 %v551, %v547
    %v932 = vpack.c.b16 %v556, %v552
    %v933 = vpack.c.b16 %v557, %v553
    %v934 = vpack.c.b16 %v558, %v554
    %v935 = vpack.c.b16 %v559, %v555
    %v936 = vpack.c.b16 %v564, %v560
    %v937 = vpack.c.b16 %v565, %v561
    %v938 = vpack.c.b16 %v566, %v562
    %v939 = vpack.c.b16 %v567, %v563
    %v940 = vpack.c.b16 %v572, %v568
    %v941 = vpack.c.b16 %v573, %v569
    %v942 = vpack.c.b16 %v574, %v570
    %v943 = vpack.c.b16 %v575, %v571
    %v944 = vpack.c.b16 %v580, %v576
    %v945 = vpack.c.b16 %v581, %v577
    %v946 = vpack.c.b16 %v582, %v578
    %v947 = vpack.c.b16 %v583, %v579
    %v948 = vpack.c.b16 %v588, %v584
    %v949 = vpack.c.b16 %v589, %v585
    %v950 = vpack.c.b16 %v590, %v586
    %v951 = vpack.c.b16 %v591, %v587
    %v952 = vpack.c.b16 %v596, %v592
    %v953 = vpack.c.b16 %v597, %v593
    %v954 = vpack.c.b16 %v598, %v594
    %v955 = vpack.c.b16 %v599, %v595
    %v956 = vpack.c.b16 %v604, %v600
    %v957 = vpack.c.b16 %v605, %v601
    %v958 = vpack.c.b16 %v606, %v602
    %v959 = vpack.c.b16 %v607, %v603
    %v960 = vpack.c.b16 %v612, %v608
    %v961 = vpack.c.b16 %v613, %v609
    %v962 = vpack.c.b16 %v614, %v610
    %v963 = vpack.c.b16 %v615, %v611
    %v964 = vpack.c.b16 %v620, %v616
    %v965 = vpack.c.b16 %v621, %v617
    %v966 = vpack.c.b16 %v622, %v618
    %v967 = vpack.c.b16 %v623, %v619
    %v968 = vpack.c.b16 %v628, %v624
    %v969 = vpack.c.b16 %v629, %v625
    %v970 = vpack.c.b16 %v630, %v626
    %v971 = vpack.c.b16 %v631, %v627
    %v972 = vpack.c.b16 %v636, %v632
    %v973 = vpack.c.b16 %v637, %v633
    %v974 = vpack.c.b16 %v638, %v634
    %v975 = vpack.c.b16 %v639, %v635
    %v976 = vpack.c.b16 %v644, %v640
    %v977 = vpack.c.b16 %v645, %v641
    %v978 = vpack.c.b16 %v646, %v642
    %v979 = vpack.c.b16 %v647, %v643
    %v980 = vpack.c.b16 %v652, %v648
    %v981 = vpack.c.b16 %v653, %v649
    %v982 = vpack.c.b16 %v654, %v650
    %v983 = vpack.c.b16 %v655, %v651
    %v984 = vpack.c.b16 %v660, %v656
    %v985 = vpack.c.b16 %v661, %v657
    %v986 = vpack.c.b16 %v662, %v658
    %v987 = vpack.c.b16 %v663, %v659
    %v988 = vpack.c.b16 %v668, %v664
    %v989 = vpack.c.b16 %v669, %v665
    %v990 = vpack.c.b16 %v670, %v666
    %v991 = vpack.c.b16 %v671, %v667
    %v992 = vpack.c.b16 %v676, %v672
    %v993 = vpack.c.b16 %v677, %v673
    %v994 = vpack.c.b16 %v678, %v674
    %v995 = vpack.c.b16 %v679, %v675
    %v996 = vpack.c.b16 %v684, %v680
    %v997 = vpack.c.b16 %v685, %v681
    %v998 = vpack.c.b16 %v686, %v682
    %v999 = vpack.c.b16 %v687, %v683
    %v1000 = vpack.c.b16 %v692, %v688
    %v1001 = vpack.c.b16 %v693, %v689
    %v1002 = vpack.c.b16 %v694, %v690
    %v1003 = vpack.c.b16 %v695, %v691
    %v1004 = vpack.c.b16 %v700, %v696
    %v1005 = vpack.c.b16 %v701, %v697
    %v1006 = vpack.c.b16 %v702, %v698
    %v1007 = vpack.c.b16 %v703, %v699
    %v1008 = vpack.c.b16 %v708, %v704
    %v1009 = vpack.c.b16 %v709, %v705
    %v1010 = vpack.c.b16 %v710, %v706
    %v1011 = vpack.c.b16 %v711, %v707
    %v1012 = vpack.c.b16 %v716, %v712
    %v1013 = vpack.c.b16 %v717, %v713
    %v1014 = vpack.c.b16 %v718, %v714
    %v1015 = vpack.c.b16 %v719, %v715
    %v1016 = vpack.c.b16 %v724, %v720
    %v1017 = vpack.c.b16 %v725, %v721
    %v1018 = vpack.c.b16 %v726, %v722
    %v1019 = vpack.c.b16 %v727, %v723
    %v1020 = vpack.c.b16 %v732, %v728
    %v1021 = vpack.c.b16 %v733, %v729
    %v1022 = vpack.c.b16 %v734, %v730
    %v1023 = vpack.c.b16 %v735, %v731
    %v1024 = vpack.c.b16 %v740, %v736
    %v1025 = vpack.c.b16 %v741, %v737
    %v1026 = vpack.c.b16 %v742, %v738
    %v1027 = vpack.c.b16 %v743, %v739
    %v1028 = vpack.c.b16 %v748, %v744
    %v1029 = vpack.c.b16 %v749, %v745
    %v1030 = vpack.c.b16 %v750, %v746
    %v1031 = vpack.c.b16 %v751, %v747
    %v1032 = vpack.c.b16 %v756, %v752
    %v1033 = vpack.c.b16 %v757, %v753
    %v1034 = vpack.c.b16 %v758, %v754
    %v1035 = vpack.c.b16 %v759, %v755
    %v1036 = vpack.c.b16 %v764, %v760
    %v1037 = vpack.c.b16 %v765, %v761
    %v1038 = vpack.c.b16 %v766, %v762
    %v1039 = vpack.c.b16 %v767, %v763
    %v1040 = vpack.c.b16 %v772, %v768
    %v1041 = vpack.c.b16 %v773, %v769
    %v1042 = vpack.c.b16 %v774, %v770
    %v1043 = vpack.c.b16 %v775, %v771
    %v1044 = vpack.c.b16 %v780, %v776
    %v1045 = vpack.c.b16 %v781, %v777
    %v1046 = vpack.c.b16 %v782, %v778
    %v1047 = vpack.c.b16 %v783, %v779
    %v1048 = vpack.c.b16 %v788, %v784
    %v1049 = vpack.c.b16 %v789, %v785
    %v1050 = vpack.c.b16 %v790, %v786
    %v1051 = vpack.c.b16 %v791, %v787
    %v1052 = vpack.c.b16 %v796, %v792
    %v1053 = vpack.c.b16 %v797, %v793
    %v1054 = vpack.c.b16 %v798, %v794
    %v1055 = vpack.c.b16 %v799, %v795
    %v1056 = vpack.c.b16 %v804, %v800
    %v1057 = vpack.c.b16 %v805, %v801
    %v1058 = vpack.c.b16 %v806, %v802
    %v1059 = vpack.c.b16 %v807, %v803
    %v1060 = vpack.c.b16 %v812, %v808
    %v1061 = vpack.c.b16 %v813, %v809
    %v1062 = vpack.c.b16 %v814, %v810
    %v1063 = vpack.c.b16 %v815, %v811
    %v1064 = vpack.c.b16 %v820, %v816
    %v1065 = vpack.c.b16 %v821, %v817
    %v1066 = vpack.c.b16 %v822, %v818
    %v1067 = vpack.c.b16 %v823, %v819
    %v1068 = vpack.c.b16 %v828, %v824
    %v1069 = vpack.c.b16 %v829, %v825
    %v1070 = vpack.c.b16 %v830, %v826
    %v1071 = vpack.c.b16 %v831, %v827
    %v1072 = vpack.c.b16 %v836, %v832
    %v1073 = vpack.c.b16 %v837, %v833
    %v1074 = vpack.c.b16 %v838, %v834
    %v1075 = vpack.c.b16 %v839, %v835
    %v1076 = vpack.c.b16 %v844, %v840
    %v1077 = vpack.c.b16 %v845, %v841
    %v1078 = vpack.c.b16 %v846, %v842
    %v1079 = vpack.c.b16 %v847, %v843
    %v1080 = vpack.c.b16 %v852, %v848
    %v1081 = vpack.c.b16 %v853, %v849
    %v1082 = vpack.c.b16 %v854, %v850
    %v1083 = vpack.c.b16 %v855, %v851
    %v1084 = vpack.c.b16 %v860, %v856
    %v1085 = vpack.c.b16 %v861, %v857
    %v1086 = vpack.c.b16 %v862, %v858
    %v1087 = vpack.c.b16 %v863, %v859
    %v1088 = vpack.c.b16 %v868, %v864
    %v1089 = vpack.c.b16 %v869, %v865
    %v1090 = vpack.c.b16 %v870, %v866
    %v1091 = vpack.c.b16 %v871, %v867
    %v1092 = vpack.c.b16 %v876, %v872
    %v1093 = vpack.c.b16 %v877, %v873
    %v1094 = vpack.c.b16 %v878, %v874
    %v1095 = vpack.c.b16 %v879, %v875
    %v1096 = vpack.c.b16 %v884, %v880
    %v1097 = vpack.c.b16 %v885, %v881
    %v1098 = vpack.c.b16 %v886, %v882
    %v1099 = vpack.c.b16 %v887, %v883
    %v1100 = vpack.c.b16 %v892, %v888
    %v1101 = vpack.c.b16 %v893, %v889
    %v1102 = vpack.c.b16 %v894, %v890
    %v1103 = vpack.c.b16 %v895, %v891
    %v1104 = vpack.c.b16 %v900, %v896
    %v1105 = vpack.c.b16 %v901, %v897
    %v1106 = vpack.c.b16 %v902, %v898
    %v1107 = vpack.c.b16 %v903, %v899
    %v1108 = vpack.c.b16 %v908, %v904
    %v1109 = vpack.c.b16 %v909, %v905
    %v1110 = vpack.c.b16 %v910, %v906
    %v1111 = vpack.c.b16 %v911, %v907
    %v1112 = vpack.c.b16 %v916, %v912
    %v1113 = vpack.c.b16 %v917, %v913
    %v1114 = vpack.c.b16 %v918, %v914
    %v1115 = vpack.c.b16 %v919, %v915
    %v1116 = vpack.c.b16 %v924, %v920
    %v1117 = vpack.c.b16 %v925, %v921
    %v1118 = vpack.c.b16 %v926, %v922
    %v1119 = vpack.c.b16 %v927, %v923
    %1312 = vmatprep.subr.bf16.mxu0 %v957
    %1313 = vmatpush1.bf16.msra.mxu0 %v956
    %1314 = vmatprep.subr.bf16.mxu0 %v953
    %1315 = vmatpush1.bf16.msra.mxu0 %v952
    %1316 = vmatprep.subr.bf16.mxu0 %v949
    %1317 = vmatpush1.bf16.msra.mxu0 %v948
    %1318 = vmatprep.subr.bf16.mxu0 %v945
    %1319 = vmatpush1.bf16.msra.mxu0 %v944
    %1320 = vmatprep.subr.bf16.mxu0 %v941
    %1321 = vmatpush1.bf16.msra.mxu0 %v940
    %1322 = vmatprep.subr.bf16.mxu0 %v937
    %1323 = vmatpush1.bf16.msra.mxu0 %v936
    %1324 = vmatprep.subr.bf16.mxu0 %v933
    %1325 = vmatpush1.bf16.msra.mxu0 %v932
    %1326 = vmatprep.subr.bf16.mxu0 %v929
    %1327 = vmatpush1.bf16.msra.mxu0 %v928
    %1328 = vmatprep.subr.bf16.mxu0 %v989
    %1329 = vmatpush2.bf16.msra.mxu0 %v988
    %1330 = vmatprep.subr.bf16.mxu0 %v985
    %1331 = vmatpush2.bf16.msra.mxu0 %v984
    %1332 = vmatprep.subr.bf16.mxu0 %v981
    %1333 = vmatpush2.bf16.msra.mxu0 %v980
    %1334 = vmatprep.subr.bf16.mxu0 %v977
    %1335 = vmatpush2.bf16.msra.mxu0 %v976
    %1336 = vmatprep.subr.bf16.mxu0 %v973
    %1337 = vmatpush2.bf16.msra.mxu0 %v972
    %1338 = vmatprep.subr.bf16.mxu0 %v969
    %1339 = vmatpush2.bf16.msra.mxu0 %v968
    %1340 = vmatprep.subr.bf16.mxu0 %v965
    %1341 = vmatpush2.bf16.msra.mxu0 %v964
    %1342 = vmatprep.subr.bf16.mxu0 %v961
    %1343 = vmatpush2.bf16.msra.mxu0 %v960
    %1344 = vmatprep.mubr.bf16.mxu0 %v336
    %1345 = vmatmul.mubr.bf16.gmra.mxu0 %v322
    %v1346 = vpop.f32.mrf.mxu0
    %v1347 = vadd.f32 0.0, %v1346
    %v1348 = vpop.f32.mrf.mxu0
    %v1349 = vadd.f32 0.0, %v1348
    %v1350 = vpop.f32.mrf.mxu0
    %v1351 = vpop.f32.mrf.mxu0
    %1352 = vdwg.mxu0
    %1353 = vmatprep.subr.bf16.mxu0 %v1021
    %1354 = vmatpush1.bf16.msra.mxu0 %v1020
    %1355 = vmatprep.subr.bf16.mxu0 %v1017
    %1356 = vmatpush1.bf16.msra.mxu0 %v1016
    %1357 = vmatprep.subr.bf16.mxu0 %v1013
    %1358 = vmatpush1.bf16.msra.mxu0 %v1012
    %1359 = vmatprep.subr.bf16.mxu0 %v1009
    %1360 = vmatpush1.bf16.msra.mxu0 %v1008
    %1361 = vmatprep.subr.bf16.mxu0 %v1005
    %1362 = vmatpush1.bf16.msra.mxu0 %v1004
    %1363 = vmatprep.subr.bf16.mxu0 %v1001
    %1364 = vmatpush1.bf16.msra.mxu0 %v1000
    %1365 = vmatprep.subr.bf16.mxu0 %v997
    %1366 = vmatpush1.bf16.msra.mxu0 %v996
    %1367 = vmatprep.subr.bf16.mxu0 %v993
    %1368 = vmatpush1.bf16.msra.mxu0 %v992
    %1369 = vmatprep.subr.bf16.mxu0 %v1053
    %1370 = vmatpush2.bf16.msra.mxu0 %v1052
    %1371 = vmatprep.subr.bf16.mxu0 %v1049
    %1372 = vmatpush2.bf16.msra.mxu0 %v1048
    %1373 = vmatprep.subr.bf16.mxu0 %v1045
    %1374 = vmatpush2.bf16.msra.mxu0 %v1044
    %1375 = vmatprep.subr.bf16.mxu0 %v1041
    %1376 = vmatpush2.bf16.msra.mxu0 %v1040
    %1377 = vmatprep.subr.bf16.mxu0 %v1037
    %1378 = vmatpush2.bf16.msra.mxu0 %v1036
    %1379 = vmatprep.subr.bf16.mxu0 %v1033
    %1380 = vmatpush2.bf16.msra.mxu0 %v1032
    %1381 = vmatprep.subr.bf16.mxu0 %v1029
    %1382 = vmatpush2.bf16.msra.mxu0 %v1028
    %1383 = vmatprep.subr.bf16.mxu0 %v1025
    %1384 = vmatpush2.bf16.msra.mxu0 %v1024
    %1385 = vmatprep.mubr.bf16.mxu0 %v345
    %1386 = vmatmul.mubr.bf16.gmra.mxu0 %v344
    %v1387 = vpop.f32.mrf.mxu0
    %v1388 = vadd.f32 %v1347, %v1387
    %v1389 = vpop.f32.mrf.mxu0
    %v1390 = vadd.f32 %v1349, %v1389
    %v1391 = vpop.f32.mrf.mxu0
    %v1392 = vpop.f32.mrf.mxu0
    %1393 = vdwg.mxu0
    %1394 = vmatprep.subr.bf16.mxu0 %v1085
    %1395 = vmatpush1.bf16.msra.mxu0 %v1084
    %1396 = vmatprep.subr.bf16.mxu0 %v1081
    %1397 = vmatpush1.bf16.msra.mxu0 %v1080
    %1398 = vmatprep.subr.bf16.mxu0 %v1077
    %1399 = vmatpush1.bf16.msra.mxu0 %v1076
    %1400 = vmatprep.subr.bf16.mxu0 %v1073
    %1401 = vmatpush1.bf16.msra.mxu0 %v1072
    %1402 = vmatprep.subr.bf16.mxu0 %v1069
    %1403 = vmatpush1.bf16.msra.mxu0 %v1068
    %1404 = vmatprep.subr.bf16.mxu0 %v1065
    %1405 = vmatpush1.bf16.msra.mxu0 %v1064
    %1406 = vmatprep.subr.bf16.mxu0 %v1061
    %1407 = vmatpush1.bf16.msra.mxu0 %v1060
    %1408 = vmatprep.subr.bf16.mxu0 %v1057
    %1409 = vmatpush1.bf16.msra.mxu0 %v1056
    %1410 = vmatprep.subr.bf16.mxu0 %v1117
    %1411 = vmatpush2.bf16.msra.mxu0 %v1116
    %1412 = vmatprep.subr.bf16.mxu0 %v1113
    %1413 = vmatpush2.bf16.msra.mxu0 %v1112
    %1414 = vmatprep.subr.bf16.mxu0 %v1109
    %1415 = vmatpush2.bf16.msra.mxu0 %v1108
    %1416 = vmatprep.subr.bf16.mxu0 %v1105
    %1417 = vmatpush2.bf16.msra.mxu0 %v1104
    %1418 = vmatprep.subr.bf16.mxu0 %v1101
    %1419 = vmatpush2.bf16.msra.mxu0 %v1100
    %1420 = vmatprep.subr.bf16.mxu0 %v1097
    %1421 = vmatpush2.bf16.msra.mxu0 %v1096
    %1422 = vmatprep.subr.bf16.mxu0 %v1093
    %1423 = vmatpush2.bf16.msra.mxu0 %v1092
    %1424 = vmatprep.subr.bf16.mxu0 %v1089
    %1425 = vmatpush2.bf16.msra.mxu0 %v1088
    %1426 = vmatprep.mubr.bf16.mxu0 %v343
    %1427 = vmatmul.mubr.bf16.gmra.mxu0 %v329
    %v1428 = vpop.f32.mrf.mxu0
    %v1429 = vadd.f32 %v1388, %v1428
    %v1430 = vpop.f32.mrf.mxu0
    %v1431 = vadd.f32 %v1390, %v1430
    %v1432 = vpop.f32.mrf.mxu0
    %v1433 = vpop.f32.mrf.mxu0
    %1434 = vdwg.mxu0
    %1435 = vmatprep.subr.bf16.mxu0 %v959
    %1436 = vmatpush1.bf16.msra.mxu0 %v958
    %1437 = vmatprep.subr.bf16.mxu0 %v955
    %1438 = vmatpush1.bf16.msra.mxu0 %v954
    %1439 = vmatprep.subr.bf16.mxu0 %v951
    %1440 = vmatpush1.bf16.msra.mxu0 %v950
    %1441 = vmatprep.subr.bf16.mxu0 %v947
    %1442 = vmatpush1.bf16.msra.mxu0 %v946
    %1443 = vmatprep.subr.bf16.mxu0 %v943
    %1444 = vmatpush1.bf16.msra.mxu0 %v942
    %1445 = vmatprep.subr.bf16.mxu0 %v939
    %1446 = vmatpush1.bf16.msra.mxu0 %v938
    %1447 = vmatprep.subr.bf16.mxu0 %v935
    %1448 = vmatpush1.bf16.msra.mxu0 %v934
    %1449 = vmatprep.subr.bf16.mxu0 %v931
    %1450 = vmatpush1.bf16.msra.mxu0 %v930
    %1451 = vmatprep.subr.bf16.mxu0 %v991
    %1452 = vmatpush2.bf16.msra.mxu0 %v990
    %1453 = vmatprep.subr.bf16.mxu0 %v987
    %1454 = vmatpush2.bf16.msra.mxu0 %v986
    %1455 = vmatprep.subr.bf16.mxu0 %v983
    %1456 = vmatpush2.bf16.msra.mxu0 %v982
    %1457 = vmatprep.subr.bf16.mxu0 %v979
    %1458 = vmatpush2.bf16.msra.mxu0 %v978
    %1459 = vmatprep.subr.bf16.mxu0 %v975
    %1460 = vmatpush2.bf16.msra.mxu0 %v974
    %1461 = vmatprep.subr.bf16.mxu0 %v971
    %1462 = vmatpush2.bf16.msra.mxu0 %v970
    %1463 = vmatprep.subr.bf16.mxu0 %v967
    %1464 = vmatpush2.bf16.msra.mxu0 %v966
    %1465 = vmatprep.subr.bf16.mxu0 %v963
    %1466 = vmatpush2.bf16.msra.mxu0 %v962
    %1467 = vmatprep.mubr.bf16.mxu0 %v336
    %1468 = vmatmul.mubr.bf16.gmra.mxu0 %v322
    %v1469 = vpop.f32.mrf.mxu0
    %v1470 = vadd.f32 0.0, %v1469
    %v1471 = vpop.f32.mrf.mxu0
    %v1472 = vadd.f32 0.0, %v1471
    %v1473 = vpop.f32.mrf.mxu0
    %v1474 = vpop.f32.mrf.mxu0
    %1475 = vdwg.mxu0
    %1476 = vmatprep.subr.bf16.mxu0 %v1023
    %1477 = vmatpush1.bf16.msra.mxu0 %v1022
    %1478 = vmatprep.subr.bf16.mxu0 %v1019
    %1479 = vmatpush1.bf16.msra.mxu0 %v1018
    %1480 = vmatprep.subr.bf16.mxu0 %v1015
    %1481 = vmatpush1.bf16.msra.mxu0 %v1014
    %1482 = vmatprep.subr.bf16.mxu0 %v1011
    %1483 = vmatpush1.bf16.msra.mxu0 %v1010
    %1484 = vmatprep.subr.bf16.mxu0 %v1007
    %1485 = vmatpush1.bf16.msra.mxu0 %v1006
    %1486 = vmatprep.subr.bf16.mxu0 %v1003
    %1487 = vmatpush1.bf16.msra.mxu0 %v1002
    %1488 = vmatprep.subr.bf16.mxu0 %v999
    %1489 = vmatpush1.bf16.msra.mxu0 %v998
    %1490 = vmatprep.subr.bf16.mxu0 %v995
    %1491 = vmatpush1.bf16.msra.mxu0 %v994
    %1492 = vmatprep.subr.bf16.mxu0 %v1055
    %1493 = vmatpush2.bf16.msra.mxu0 %v1054
    %1494 = vmatprep.subr.bf16.mxu0 %v1051
    %1495 = vmatpush2.bf16.msra.mxu0 %v1050
    %1496 = vmatprep.subr.bf16.mxu0 %v1047
    %1497 = vmatpush2.bf16.msra.mxu0 %v1046
    %1498 = vmatprep.subr.bf16.mxu0 %v1043
    %1499 = vmatpush2.bf16.msra.mxu0 %v1042
    %1500 = vmatprep.subr.bf16.mxu0 %v1039
    %1501 = vmatpush2.bf16.msra.mxu0 %v1038
    %1502 = vmatprep.subr.bf16.mxu0 %v1035
    %1503 = vmatpush2.bf16.msra.mxu0 %v1034
    %1504 = vmatprep.subr.bf16.mxu0 %v1031
    %1505 = vmatpush2.bf16.msra.mxu0 %v1030
    %1506 = vmatprep.subr.bf16.mxu0 %v1027
    %1507 = vmatpush2.bf16.msra.mxu0 %v1026
    %1508 = vmatprep.mubr.bf16.mxu0 %v345
    %1509 = vmatmul.mubr.bf16.gmra.mxu0 %v344
    %v1510 = vpop.f32.mrf.mxu0
    %v1511 = vadd.f32 %v1470, %v1510
    %v1512 = vpop.f32.mrf.mxu0
    %v1513 = vadd.f32 %v1472, %v1512
    %v1514 = vpop.f32.mrf.mxu0
    %v1515 = vpop.f32.mrf.mxu0
    %1516 = vdwg.mxu0
    %1517 = vmatprep.subr.bf16.mxu0 %v1087
    %1518 = vmatpush1.bf16.msra.mxu0 %v1086
    %1519 = vmatprep.subr.bf16.mxu0 %v1083
    %1520 = vmatpush1.bf16.msra.mxu0 %v1082
    %1521 = vmatprep.subr.bf16.mxu0 %v1079
    %1522 = vmatpush1.bf16.msra.mxu0 %v1078
    %1523 = vmatprep.subr.bf16.mxu0 %v1075
    %1524 = vmatpush1.bf16.msra.mxu0 %v1074
    %1525 = vmatprep.subr.bf16.mxu0 %v1071
    %1526 = vmatpush1.bf16.msra.mxu0 %v1070
    %1527 = vmatprep.subr.bf16.mxu0 %v1067
    %1528 = vmatpush1.bf16.msra.mxu0 %v1066
    %1529 = vmatprep.subr.bf16.mxu0 %v1063
    %1530 = vmatpush1.bf16.msra.mxu0 %v1062
    %1531 = vmatprep.subr.bf16.mxu0 %v1059
    %1532 = vmatpush1.bf16.msra.mxu0 %v1058
    %1533 = vmatprep.subr.bf16.mxu0 %v1119
    %1534 = vmatpush2.bf16.msra.mxu0 %v1118
    %1535 = vmatprep.subr.bf16.mxu0 %v1115
    %1536 = vmatpush2.bf16.msra.mxu0 %v1114
    %1537 = vmatprep.subr.bf16.mxu0 %v1111
    %1538 = vmatpush2.bf16.msra.mxu0 %v1110
    %1539 = vmatprep.subr.bf16.mxu0 %v1107
    %1540 = vmatpush2.bf16.msra.mxu0 %v1106
    %1541 = vmatprep.subr.bf16.mxu0 %v1103
    %1542 = vmatpush2.bf16.msra.mxu0 %v1102
    %1543 = vmatprep.subr.bf16.mxu0 %v1099
    %1544 = vmatpush2.bf16.msra.mxu0 %v1098
    %1545 = vmatprep.subr.bf16.mxu0 %v1095
    %1546 = vmatpush2.bf16.msra.mxu0 %v1094
    %1547 = vmatprep.subr.bf16.mxu0 %v1091
    %1548 = vmatpush2.bf16.msra.mxu0 %v1090
    %1549 = vmatprep.mubr.bf16.mxu0 %v343
    %1550 = vmatmul.mubr.bf16.gmra.mxu0 %v329
    %v1551 = vpop.f32.mrf.mxu0
    %v1552 = vadd.f32 %v1511, %v1551
    %v1553 = vpop.f32.mrf.mxu0
    %v1554 = vadd.f32 %v1513, %v1553
    %v1555 = vpop.f32.mrf.mxu0
    %v1556 = vpop.f32.mrf.mxu0
    %1557 = vdwg.mxu0
    %v1558 = vadd.f32 %v1429, %v1431
    %v1559 = vadd.f32 %v1558, %v1552
    %v1560 = vadd.f32 %v1559, %v1554
    %1561 = vadd.xlane.f32.xlu0 %v1560
    %v1562 = vpop.xlane.xlu0 %1561
    %v1563 = vrcp.pop 512.0
    %v1564 = vmul.f32 %v1562, %v1563
    %v1565 = vmul.f32 %v1429, %v1429
    %v1566 = vmul.f32 %v1431, %v1431
    %v1567 = vmul.f32 %v1552, %v1552
    %v1568 = vmul.f32 %v1554, %v1554
    %v1569 = vadd.f32 %v1565, %v1566
    %v1570 = vadd.f32 %v1569, %v1567
    %v1571 = vadd.f32 %v1570, %v1568
    %1572 = vadd.xlane.f32.xlu0 %v1571
    %v1573 = vpop.xlane.xlu0 %1572
    %v1574 = vmul.f32 %v1573, %v1563
    %v1575 = vmul.f32 %v1564, %v1564
    %v1576 = vsub.f32 %v1574, %v1575
    %v1577 = vsub.f32 %v1429, %v1564
    %v1578 = vsub.f32 %v1431, %v1564
    %v1579 = vsub.f32 %v1552, %v1564
    %v1580 = vsub.f32 %v1554, %v1564
    %v1581 = vadd.f32 %v1576, 1e-05
    %v1582 = vrsqrt.pop %v1581
    %v1583 = vmul.f32 %v1577, %v1582
    %v1584 = vmul.f32 %v1578, %v1582
    %v1585 = vmul.f32 %v1579, %v1582
    %v1586 = vmul.f32 %v1580, %v1582
    %v1587 = vpack.c.bf16 %v1583, %v1583
    %v1588 = vpack.c.bf16 %v1584, %v1584
    %v1589 = vpack.c.bf16 %v1585, %v1585
    %v1590 = vpack.c.bf16 %v1586, %v1586
    %v1591 = vld [vmem:[#allocation7] sm:$0xf]
    %v1592 = vld [vmem:[#allocation7 + $0x4] sm:$0xf]
    %v1593 = vld [vmem:[#allocation7 + $0x8] sm:$0xf]
    %v1594 = vld [vmem:[#allocation7 + $0xc] sm:$0xf]
    %v1595 = vld [vmem:[#allocation7 + $0x10] sm:$0xf]
    %v1596 = vld [vmem:[#allocation7 + $0x14] sm:$0xf]
    %v1597 = vld [vmem:[#allocation7 + $0x18] sm:$0xf]
    %v1598 = vld [vmem:[#allocation7 + $0x1c] sm:$0xf]
    %v1599 = vld [vmem:[#allocation7 + $0x20] sm:$0xf]
    %v1600 = vld [vmem:[#allocation7 + $0x24] sm:$0xf]
    %v1601 = vld [vmem:[#allocation7 + $0x28] sm:$0xf]
    %v1602 = vld [vmem:[#allocation7 + $0x2c] sm:$0xf]
    %v1603 = vld [vmem:[#allocation7 + $0x30] sm:$0xf]
    %v1604 = vld [vmem:[#allocation7 + $0x34] sm:$0xf]
    %v1605 = vld [vmem:[#allocation7 + $0x38] sm:$0xf]
    %v1606 = vld [vmem:[#allocation7 + $0x3c] sm:$0xf]
    %v1607 = vld [vmem:[#allocation7 + $0x40] sm:$0xf]
    %v1608 = vld [vmem:[#allocation7 + $0x44] sm:$0xf]
    %v1609 = vld [vmem:[#allocation7 + $0x48] sm:$0xf]
    %v1610 = vld [vmem:[#allocation7 + $0x4c] sm:$0xf]
    %v1611 = vld [vmem:[#allocation7 + $0x50] sm:$0xf]
    %v1612 = vld [vmem:[#allocation7 + $0x54] sm:$0xf]
    %v1613 = vld [vmem:[#allocation7 + $0x58] sm:$0xf]
    %v1614 = vld [vmem:[#allocation7 + $0x5c] sm:$0xf]
    %v1615 = vld [vmem:[#allocation7 + $0x60] sm:$0xf]
    %v1616 = vld [vmem:[#allocation7 + $0x64] sm:$0xf]
    %v1617 = vld [vmem:[#allocation7 + $0x68] sm:$0xf]
    %v1618 = vld [vmem:[#allocation7 + $0x6c] sm:$0xf]
    %v1619 = vld [vmem:[#allocation7 + $0x70] sm:$0xf]
    %v1620 = vld [vmem:[#allocation7 + $0x74] sm:$0xf]
    %v1621 = vld [vmem:[#allocation7 + $0x78] sm:$0xf]
    %v1622 = vld [vmem:[#allocation7 + $0x7c] sm:$0xf]
    %v1623 = vld [vmem:[#allocation7 + $0x80] sm:$0xf]
    %v1624 = vld [vmem:[#allocation7 + $0x84] sm:$0xf]
    %v1625 = vld [vmem:[#allocation7 + $0x88] sm:$0xf]
    %v1626 = vld [vmem:[#allocation7 + $0x8c] sm:$0xf]
    %v1627 = vld [vmem:[#allocation7 + $0x90] sm:$0xf]
    %v1628 = vld [vmem:[#allocation7 + $0x94] sm:$0xf]
    %v1629 = vld [vmem:[#allocation7 + $0x98] sm:$0xf]
    %v1630 = vld [vmem:[#allocation7 + $0x9c] sm:$0xf]
    %v1631 = vld [vmem:[#allocation7 + $0xa0] sm:$0xf]
    %v1632 = vld [vmem:[#allocation7 + $0xa4] sm:$0xf]
    %v1633 = vld [vmem:[#allocation7 + $0xa8] sm:$0xf]
    %v1634 = vld [vmem:[#allocation7 + $0xac] sm:$0xf]
    %v1635 = vld [vmem:[#allocation7 + $0xb0] sm:$0xf]
    %v1636 = vld [vmem:[#allocation7 + $0xb4] sm:$0xf]
    %v1637 = vld [vmem:[#allocation7 + $0xb8] sm:$0xf]
    %v1638 = vld [vmem:[#allocation7 + $0xbc] sm:$0xf]
    %v1639 = vld [vmem:[#allocation7 + $0xc0] sm:$0xf]
    %v1640 = vld [vmem:[#allocation7 + $0xc4] sm:$0xf]
    %v1641 = vld [vmem:[#allocation7 + $0xc8] sm:$0xf]
    %v1642 = vld [vmem:[#allocation7 + $0xcc] sm:$0xf]
    %v1643 = vld [vmem:[#allocation7 + $0xd0] sm:$0xf]
    %v1644 = vld [vmem:[#allocation7 + $0xd4] sm:$0xf]
    %v1645 = vld [vmem:[#allocation7 + $0xd8] sm:$0xf]
    %v1646 = vld [vmem:[#allocation7 + $0xdc] sm:$0xf]
    %v1647 = vld [vmem:[#allocation7 + $0xe0] sm:$0xf]
    %v1648 = vld [vmem:[#allocation7 + $0xe4] sm:$0xf]
    %v1649 = vld [vmem:[#allocation7 + $0xe8] sm:$0xf]
    %v1650 = vld [vmem:[#allocation7 + $0xec] sm:$0xf]
    %v1651 = vld [vmem:[#allocation7 + $0xf0] sm:$0xf]
    %v1652 = vld [vmem:[#allocation7 + $0xf4] sm:$0xf]
    %v1653 = vld [vmem:[#allocation7 + $0xf8] sm:$0xf]
    %v1654 = vld [vmem:[#allocation7 + $0xfc] sm:$0xf]
    %v1655 = vld [vmem:[%s3] sm:$0x1]
    %v1657 = vlaneseq
    %v1658 = vshrl.u32 %v1657, 7
    %v1659 = vsub.s32 0, %v1658
    %v1660 = vrot.slane %v1655, %v1659
    %v1726 = vunpack.c.l.b16 %v1591
    %v1727 = vunpack.c.l.b16 %v1592
    %v1728 = vunpack.c.l.b16 %v1593
    %v1729 = vunpack.c.l.b16 %v1594
    %v1730 = vunpack.c.l.b16 %v1595
    %v1731 = vunpack.c.l.b16 %v1596
    %v1732 = vunpack.c.l.b16 %v1597
    %v1733 = vunpack.c.l.b16 %v1598
    %v1734 = vunpack.c.l.b16 %v1599
    %v1735 = vunpack.c.l.b16 %v1600
    %v1736 = vunpack.c.l.b16 %v1601
    %v1737 = vunpack.c.l.b16 %v1602
    %v1738 = vunpack.c.l.b16 %v1603
    %v1739 = vunpack.c.l.b16 %v1604
    %v1740 = vunpack.c.l.b16 %v1605
    %v1741 = vunpack.c.l.b16 %v1606
    %v1742 = vunpack.c.l.b16 %v1607
    %v1743 = vunpack.c.l.b16 %v1608
    %v1744 = vunpack.c.l.b16 %v1609
    %v1745 = vunpack.c.l.b16 %v1610
    %v1746 = vunpack.c.l.b16 %v1611
    %v1747 = vunpack.c.l.b16 %v1612
    %v1748 = vunpack.c.l.b16 %v1613
    %v1749 = vunpack.c.l.b16 %v1614
    %v1750 = vunpack.c.l.b16 %v1615
    %v1751 = vunpack.c.l.b16 %v1616
    %v1752 = vunpack.c.l.b16 %v1617
    %v1753 = vunpack.c.l.b16 %v1618
    %v1754 = vunpack.c.l.b16 %v1619
    %v1755 = vunpack.c.l.b16 %v1620
    %v1756 = vunpack.c.l.b16 %v1621
    %v1757 = vunpack.c.l.b16 %v1622
    %v1758 = vunpack.c.l.b16 %v1623
    %v1759 = vunpack.c.l.b16 %v1624
    %v1760 = vunpack.c.l.b16 %v1625
    %v1761 = vunpack.c.l.b16 %v1626
    %v1762 = vunpack.c.l.b16 %v1627
    %v1763 = vunpack.c.l.b16 %v1628
    %v1764 = vunpack.c.l.b16 %v1629
    %v1765 = vunpack.c.l.b16 %v1630
    %v1766 = vunpack.c.l.b16 %v1631
    %v1767 = vunpack.c.l.b16 %v1632
    %v1768 = vunpack.c.l.b16 %v1633
    %v1769 = vunpack.c.l.b16 %v1634
    %v1770 = vunpack.c.l.b16 %v1635
    %v1771 = vunpack.c.l.b16 %v1636
    %v1772 = vunpack.c.l.b16 %v1637
    %v1773 = vunpack.c.l.b16 %v1638
    %v1774 = vunpack.c.l.b16 %v1639
    %v1775 = vunpack.c.l.b16 %v1640
    %v1776 = vunpack.c.l.b16 %v1641
    %v1777 = vunpack.c.l.b16 %v1642
    %v1778 = vunpack.c.l.b16 %v1643
    %v1779 = vunpack.c.l.b16 %v1644
    %v1780 = vunpack.c.l.b16 %v1645
    %v1781 = vunpack.c.l.b16 %v1646
    %v1782 = vunpack.c.l.b16 %v1647
    %v1783 = vunpack.c.l.b16 %v1648
    %v1784 = vunpack.c.l.b16 %v1649
    %v1785 = vunpack.c.l.b16 %v1650
    %v1786 = vunpack.c.l.b16 %v1651
    %v1787 = vunpack.c.l.b16 %v1652
    %v1788 = vunpack.c.l.b16 %v1653
    %v1789 = vunpack.c.l.b16 %v1654
    %v1790 = vpack.c.b16 %v1727, %v1726
    %v1791 = vpack.c.b16 %v1729, %v1728
    %v1792 = vpack.c.b16 %v1731, %v1730
    %v1793 = vpack.c.b16 %v1733, %v1732
    %v1794 = vpack.c.b16 %v1735, %v1734
    %v1795 = vpack.c.b16 %v1737, %v1736
    %v1796 = vpack.c.b16 %v1739, %v1738
    %v1797 = vpack.c.b16 %v1741, %v1740
    %v1798 = vpack.c.b16 %v1743, %v1742
    %v1799 = vpack.c.b16 %v1745, %v1744
    %v1800 = vpack.c.b16 %v1747, %v1746
    %v1801 = vpack.c.b16 %v1749, %v1748
    %v1802 = vpack.c.b16 %v1751, %v1750
    %v1803 = vpack.c.b16 %v1753, %v1752
    %v1804 = vpack.c.b16 %v1755, %v1754
    %v1805 = vpack.c.b16 %v1757, %v1756
    %v1806 = vpack.c.b16 %v1759, %v1758
    %v1807 = vpack.c.b16 %v1761, %v1760
    %v1808 = vpack.c.b16 %v1763, %v1762
    %v1809 = vpack.c.b16 %v1765, %v1764
    %v1810 = vpack.c.b16 %v1767, %v1766
    %v1811 = vpack.c.b16 %v1769, %v1768
    %v1812 = vpack.c.b16 %v1771, %v1770
    %v1813 = vpack.c.b16 %v1773, %v1772
    %v1814 = vpack.c.b16 %v1775, %v1774
    %v1815 = vpack.c.b16 %v1777, %v1776
    %v1816 = vpack.c.b16 %v1779, %v1778
    %v1817 = vpack.c.b16 %v1781, %v1780
    %v1818 = vpack.c.b16 %v1783, %v1782
    %v1819 = vpack.c.b16 %v1785, %v1784
    %v1820 = vpack.c.b16 %v1787, %v1786
    %v1821 = vpack.c.b16 %v1789, %v1788
    %1854 = vmatprep.subr.bf16.mxu0 0
    %1855 = vmatpush1.bf16.msra.mxu0 %v1797
    %1856 = vmatprep.subr.bf16.mxu0 0
    %1857 = vmatpush1.bf16.msra.mxu0 %v1796
    %1858 = vmatprep.subr.bf16.mxu0 0
    %1859 = vmatpush1.bf16.msra.mxu0 %v1795
    %1860 = vmatprep.subr.bf16.mxu0 0
    %1861 = vmatpush1.bf16.msra.mxu0 %v1794
    %1862 = vmatprep.subr.bf16.mxu0 0
    %1863 = vmatpush1.bf16.msra.mxu0 %v1793
    %1864 = vmatprep.subr.bf16.mxu0 0
    %1865 = vmatpush1.bf16.msra.mxu0 %v1792
    %1866 = vmatprep.subr.bf16.mxu0 0
    %1867 = vmatpush1.bf16.msra.mxu0 %v1791
    %1868 = vmatprep.subr.bf16.mxu0 0
    %1869 = vmatpush1.bf16.msra.mxu0 %v1790
    %1870 = vmatprep.subr.bf16.mxu0 0
    %1871 = vmatpush2.bf16.msra.mxu0 %v1805
    %1872 = vmatprep.subr.bf16.mxu0 0
    %1873 = vmatpush2.bf16.msra.mxu0 %v1804
    %1874 = vmatprep.subr.bf16.mxu0 0
    %1875 = vmatpush2.bf16.msra.mxu0 %v1803
    %1876 = vmatprep.subr.bf16.mxu0 0
    %1877 = vmatpush2.bf16.msra.mxu0 %v1802
    %1878 = vmatprep.subr.bf16.mxu0 0
    %1879 = vmatpush2.bf16.msra.mxu0 %v1801
    %1880 = vmatprep.subr.bf16.mxu0 0
    %1881 = vmatpush2.bf16.msra.mxu0 %v1800
    %1882 = vmatprep.subr.bf16.mxu0 0
    %1883 = vmatpush2.bf16.msra.mxu0 %v1799
    %1884 = vmatprep.subr.bf16.mxu0 0
    %1885 = vmatpush2.bf16.msra.mxu0 %v1798
    %1886 = vmatprep.mubr.bf16.mxu0 %v1588
    %1887 = vmatmul.mubr.bf16.gmra.mxu0 %v1587
    %v1888 = vpop.f32.mrf.mxu0
    %v1889 = vadd.f32 %v1660, %v1888
    %v1890 = vpop.f32.mrf.mxu0
    %v1891 = vpop.f32.mrf.mxu0
    %v1892 = vpop.f32.mrf.mxu0
    %1893 = vdwg.mxu0
    %1894 = vmatprep.subr.bf16.mxu0 0
    %1895 = vmatpush1.bf16.msra.mxu0 %v1813
    %1896 = vmatprep.subr.bf16.mxu0 0
    %1897 = vmatpush1.bf16.msra.mxu0 %v1812
    %1898 = vmatprep.subr.bf16.mxu0 0
    %1899 = vmatpush1.bf16.msra.mxu0 %v1811
    %1900 = vmatprep.subr.bf16.mxu0 0
    %1901 = vmatpush1.bf16.msra.mxu0 %v1810
    %1902 = vmatprep.subr.bf16.mxu0 0
    %1903 = vmatpush1.bf16.msra.mxu0 %v1809
    %1904 = vmatprep.subr.bf16.mxu0 0
    %1905 = vmatpush1.bf16.msra.mxu0 %v1808
    %1906 = vmatprep.subr.bf16.mxu0 0
    %1907 = vmatpush1.bf16.msra.mxu0 %v1807
    %1908 = vmatprep.subr.bf16.mxu0 0
    %1909 = vmatpush1.bf16.msra.mxu0 %v1806
    %1910 = vmatprep.subr.bf16.mxu0 0
    %1911 = vmatpush2.bf16.msra.mxu0 %v1821
    %1912 = vmatprep.subr.bf16.mxu0 0
    %1913 = vmatpush2.bf16.msra.mxu0 %v1820
    %1914 = vmatprep.subr.bf16.mxu0 0
    %1915 = vmatpush2.bf16.msra.mxu0 %v1819
    %1916 = vmatprep.subr.bf16.mxu0 0
    %1917 = vmatpush2.bf16.msra.mxu0 %v1818
    %1918 = vmatprep.subr.bf16.mxu0 0
    %1919 = vmatpush2.bf16.msra.mxu0 %v1817
    %1920 = vmatprep.subr.bf16.mxu0 0
    %1921 = vmatpush2.bf16.msra.mxu0 %v1816
    %1922 = vmatprep.subr.bf16.mxu0 0
    %1923 = vmatpush2.bf16.msra.mxu0 %v1815
    %1924 = vmatprep.subr.bf16.mxu0 0
    %1925 = vmatpush2.bf16.msra.mxu0 %v1814
    %1926 = vmatprep.mubr.bf16.mxu0 %v1590
    %1927 = vmatmul.mubr.bf16.gmra.mxu0 %v1589
    %v1928 = vpop.f32.mrf.mxu0
    %v1929 = vadd.f32 %v1889, %v1928
    %v1930 = vpop.f32.mrf.mxu0
    %v1931 = vpop.f32.mrf.mxu0
    %v1932 = vpop.f32.mrf.mxu0
    %1933 = vdwg.mxu0
    %v1934 = vmax.f32 %v1929, 0.0
    %v1935 = vpack.c.bf16 %v1934, %v1934
    %v1936 = vld [vmem:[#allocation8] sm:$0xf]
    %v1937 = vld [vmem:[#allocation8 + $0x4] sm:$0xf]
    %v1938 = vld [vmem:[#allocation8 + $0x8] sm:$0xf]
    %v1939 = vld [vmem:[#allocation8 + $0xc] sm:$0xf]
    %v1940 = vld [vmem:[#allocation8 + $0x10] sm:$0xf]
    %v1941 = vld [vmem:[#allocation8 + $0x14] sm:$0xf]
    %v1942 = vld [vmem:[#allocation8 + $0x18] sm:$0xf]
    %v1943 = vld [vmem:[#allocation8 + $0x1c] sm:$0xf]
    %v1944 = vld [vmem:[#allocation8 + $0x20] sm:$0xf]
    %v1945 = vld [vmem:[#allocation8 + $0x24] sm:$0xf]
    %v1946 = vld [vmem:[#allocation8 + $0x28] sm:$0xf]
    %v1947 = vld [vmem:[#allocation8 + $0x2c] sm:$0xf]
    %v1948 = vld [vmem:[#allocation8 + $0x30] sm:$0xf]
    %v1949 = vld [vmem:[#allocation8 + $0x34] sm:$0xf]
    %v1950 = vld [vmem:[#allocation8 + $0x38] sm:$0xf]
    %v1951 = vld [vmem:[#allocation8 + $0x3c] sm:$0xf]
    %v1952 = vld [vmem:[%s5] sm:$0x1]
    %v1954 = vlaneseq
    %v1955 = vshrl.u32 %v1954, 7
    %v1956 = vsub.s32 0, %v1955
    %v1957 = vrot.slane %v1952, %v1956
    %v1975 = vunpack.c.l.b16 %v1936
    %v1976 = vunpack.c.l.b16 %v1937
    %v1977 = vunpack.c.l.b16 %v1938
    %v1978 = vunpack.c.l.b16 %v1939
    %v1979 = vunpack.c.l.b16 %v1940
    %v1980 = vunpack.c.l.b16 %v1941
    %v1981 = vunpack.c.l.b16 %v1942
    %v1982 = vunpack.c.l.b16 %v1943
    %v1983 = vunpack.c.l.b16 %v1944
    %v1984 = vunpack.c.l.b16 %v1945
    %v1985 = vunpack.c.l.b16 %v1946
    %v1986 = vunpack.c.l.b16 %v1947
    %v1987 = vunpack.c.l.b16 %v1948
    %v1988 = vunpack.c.l.b16 %v1949
    %v1989 = vunpack.c.l.b16 %v1950
    %v1990 = vunpack.c.l.b16 %v1951
    %v1991 = vpack.c.b16 %v1976, %v1975
    %v1992 = vpack.c.b16 %v1978, %v1977
    %v1993 = vpack.c.b16 %v1980, %v1979
    %v1994 = vpack.c.b16 %v1982, %v1981
    %v1995 = vpack.c.b16 %v1984, %v1983
    %v1996 = vpack.c.b16 %v1986, %v1985
    %v1997 = vpack.c.b16 %v1988, %v1987
    %v1998 = vpack.c.b16 %v1990, %v1989
    %2007 = vmatprep.subr.bf16.mxu0 0
    %2008 = vmatpush1.bf16.msra.mxu0 %v1998
    %2009 = vmatprep.subr.bf16.mxu0 0
    %2010 = vmatpush1.bf16.msra.mxu0 %v1997
    %2011 = vmatprep.subr.bf16.mxu0 0
    %2012 = vmatpush1.bf16.msra.mxu0 %v1996
    %2013 = vmatprep.subr.bf16.mxu0 0
    %2014 = vmatpush1.bf16.msra.mxu0 %v1995
    %2015 = vmatprep.subr.bf16.mxu0 0
    %2016 = vmatpush1.bf16.msra.mxu0 %v1994
    %2017 = vmatprep.subr.bf16.mxu0 0
    %2018 = vmatpush1.bf16.msra.mxu0 %v1993
    %2019 = vmatprep.subr.bf16.mxu0 0
    %2020 = vmatpush1.bf16.msra.mxu0 %v1992
    %2021 = vmatprep.subr.bf16.mxu0 0
    %2022 = vmatpush1.bf16.msra.mxu0 %v1991
    %2023 = vmatprep.subr.bf16.mxu0 0
    %2024 = vmatpush2.bf16.msra.mxu0 0
    %2025 = vmatprep.subr.bf16.mxu0 0
    %2026 = vmatpush2.bf16.msra.mxu0 0
    %2027 = vmatprep.subr.bf16.mxu0 0
    %2028 = vmatpush2.bf16.msra.mxu0 0
    %2029 = vmatprep.subr.bf16.mxu0 0
    %2030 = vmatpush2.bf16.msra.mxu0 0
    %2031 = vmatprep.subr.bf16.mxu0 0
    %2032 = vmatpush2.bf16.msra.mxu0 0
    %2033 = vmatprep.subr.bf16.mxu0 0
    %2034 = vmatpush2.bf16.msra.mxu0 0
    %2035 = vmatprep.subr.bf16.mxu0 0
    %2036 = vmatpush2.bf16.msra.mxu0 0
    %2037 = vmatprep.subr.bf16.mxu0 0
    %2038 = vmatpush2.bf16.msra.mxu0 0
    %2039 = vmatprep.mubr.bf16.mxu0 0
    %2040 = vmatmul.mubr.bf16.gmra.mxu0 %v1935
    %v2041 = vpop.f32.mrf.mxu0
    %v2042 = vadd.f32 %v1957, %v2041
    %v2043 = vpop.f32.mrf.mxu0
    %v2044 = vpop.f32.mrf.mxu0
    %v2045 = vpop.f32.mrf.mxu0
    %2046 = vdwg.mxu0
    %2047 = vst [vmem:[#allocation10] sm:$0xff] %v2042
    // Predicated region
    $region42: #{tpu_custom_call.1} parent=1 // pred_check
      _
    $region43: #{tpu_custom_call.1} parent=1 // pred_check_branch
      %2049 = sbr.rel (0) target = $region45
    $region44: #{tpu_custom_call.1} parent=1 // pred_region
      %s2051 = ssub.s32 128, 32
      %2052 = vsyncadd [#allocation4], %s2051
      %s2053 = sshll.u32 [#allocation10], 4
      %s2054 = int_to_ptr.vmem [resolvable:$true] %s2053
      %2059 = dma.vmem_to_hbm [thread:$0]  %s2054, 32, %s6, [#allocation4], 32, 32, 2
    $region45: #{tpu_custom_call.1} parent=1 // pred_fallthru
      _
    // Predicated region
    $region46: #{tpu_custom_call.1} parent=1 // pred_check
      _
    $region47: #{tpu_custom_call.1} parent=1 // pred_check_branch
      %2061 = sbr.rel (0) target = $region49
    $region48: #{tpu_custom_call.1} parent=1 // pred_region
      %2062 = dma.done [#allocation4], 128
    $region49: #{tpu_custom_call.1} parent=1 // pred_fallthru
      _
    %2063 = vsyncpa [#allocation3], 1
    %2064 = vsyncpa [#allocation6], 1
    %2065 = vsyncpa [#allocation9], 1
    %2066 = vsyncpa [#allocation4], 1

</llo_original>
